<compile_context>
chip_gen: v7x
topology: tpu7x:2x2x1
jax: 0.10.0
libtpu: 0.0.40
codegen_flags: <defaults>
</compile_context>

<pallas_src>
import functools

import jax
import jax.numpy as jnp
from jax import lax
from jax.experimental import pallas as pl
from jax.experimental.pallas import tpu as pltpu


def _pick_block(n, requested):
    """Largest divisor of n that is <= requested (keeps the grid exact)."""
    b = max(1, min(int(requested), int(n)))
    while n % b:
        b -= 1
    return b


def _conv_stats_kernel(patch_ref, wt_ref, bvec_ref, pre_ref, stats_ref, *,
                       O, HW, scale):
    # patch_ref: (Kp, B*HW)   im2col patches, K-major (bf16 or f32)
    # wt_ref:    (Oc, Kp)     conv taps + mask window-count row O (bf16/f32)
    # bvec_ref:  (Oc, 1)      per-channel bias (f32, zero-padded)
    # pre_ref:   (B*O, HW)    pre-BN activations, channels-first per image
    # stats_ref: (1, Oc, 2)   per-step [sum, sum_sq] of bias-free pre
    B = pre_ref.shape[0] // O

    # Single fused MXU matmul, result already channels-first: (Oc, B*HW) f32.
    res = jnp.dot(wt_ref[...], patch_ref[...],
                  preferred_element_type=jnp.float32)

    # Row O holds the exact 3x3 mask window count (0/1 inputs, f32 accum).
    cnt = res[O:O + 1, :]                                     # (1, B*HW)
    norm = jnp.where(cnt == 0.0, 0.0,
                     scale / jnp.where(cnt == 0.0, 1.0, cnt))
    pre_nb = res * norm                                       # bias-free (f32)

    # Shifted single-pass BN partial statistics (bias added back in wrapper).
    s = jnp.sum(pre_nb, axis=1, keepdims=True)                # (Oc, 1)
    ss = jnp.sum(pre_nb * pre_nb, axis=1, keepdims=True)      # (Oc, 1)
    stats_ref[0] = jnp.concatenate([s, ss], axis=1)           # (Oc, 2)

    pre = pre_nb + bvec_ref[...]                              # (Oc, B*HW)

    # Slice to the O real channels and stack images along sublanes:
    # (B*O, HW) lane-dense store, no transpose needed.
    chunks = [pre[:O, b * HW:(b + 1) * HW] for b in range(B)]
    pre_ref[...] = jnp.concatenate(chunks, axis=0).astype(pre_ref.dtype)


def _bn_apply_kernel(pre_ref, scale_ref, shift_ref, out_ref):
    # pre_ref/out_ref: (B*O, HW); scale_ref/shift_ref: (B*O, 1)
    x = pre_ref[...].astype(jnp.float32)
    out_ref[...] = (x * scale_ref[...] + shift_ref[...]).astype(out_ref.dtype)


def sparse_scaled_bn_conv2d(x_nchw, binary_mask_n1hw, w_hwio, bias, gamma,
                            beta, *, scale=9.0, eps=1e-5, block_b=8,
                            use_bf16=True):
    """NCHW in / NCHW out, matching the PyTorch module's forward()."""
    N, C, H, W = x_nchw.shape
    KH, KW, _, O = w_hwio.shape
    assert (KH, KW) == (3, 3)
    if binary_mask_n1hw is None:
        binary_mask_n1hw = jnp.ones((N, 1, H, W), jnp.float32)

    HW = H * W
    KK = 9
    Kreal = KK * (C + 1)
    Kp = ((Kreal + 127) // 128) * 128          # lane-padded contraction dim
    Oc = ((O + 1 + 127) // 128) * 128          # padded output channels (+count)
    B = _pick_block(N, block_b)                # images per grid step
    G = N // B
    mm_dtype = jnp.bfloat16 if use_bf16 else jnp.float32
    pre_dtype = jnp.bfloat16 if use_bf16 else jnp.float32

    # ---- input packing (XLA): mask multiply + [feat|mask] + dense im2col ----
    x = x_nchw.astype(jnp.float32)
    m = binary_mask_n1hw.astype(jnp.float32)
    xm = jnp.concatenate([x * m, m], axis=1)                    # (N, C+1, H, W)
    xm = jnp.pad(xm, ((0, 0), (0, 0), (1, 1), (1, 1)))          # 1-px halo
    taps = [xm[:, :, dy:dy + H, dx:dx + W]
            for dy in range(3) for dx in range(3)]
    patches = jnp.concatenate(taps, axis=1)                     # (N, Kreal, H, W)
    patches = jnp.transpose(patches, (1, 0, 2, 3)).reshape(Kreal, N * HW)
    patches = jnp.pad(patches, ((0, Kp - Kreal), (0, 0))).astype(mm_dtype)

    # ---- weight packing: conv taps + ones window-count column --------------
    w_taps = w_hwio.astype(jnp.float32).reshape(KK, C, O)
    w_aug = jnp.concatenate([w_taps, jnp.zeros((KK, 1, O), jnp.float32)],
                            axis=1)                             # (9, C+1, O)
    wmat = jnp.zeros((Kp, Oc), jnp.float32)
    wmat = wmat.at[:Kreal, :O].set(w_aug.reshape(Kreal, O))
    wmat = wmat.at[jnp.arange(KK) * (C + 1) + C, O].set(1.0)    # count column
    wt = jnp.transpose(wmat).astype(mm_dtype)                   # (Oc, Kp)
    bvec = jnp.zeros((Oc, 1), jnp.float32).at[:O, 0].set(bias.astype(jnp.float32))

    cparams = pltpu.CompilerParams(
        dimension_semantics=("parallel",),
        vmem_limit_bytes=32 * 1024 * 1024)      # safe on v5e/v6e/v7x (64 MiB)

    # ---- Phase 1: fused conv + count + norm + bias + BN partial stats ------
    kern1 = functools.partial(_conv_stats_kernel, O=O, HW=HW, scale=float(scale))
    pre, stats = pl.pallas_call(
        kern1,
        out_shape=(jax.ShapeDtypeStruct((N * O, HW), pre_dtype),
                   jax.ShapeDtypeStruct((G, Oc, 2), jnp.float32)),
        grid=(G,),
        in_specs=[
            pl.BlockSpec((Kp, B * HW), lambda n: (0, n)),
            pl.BlockSpec((Oc, Kp), lambda n: (0, 0)),
            pl.BlockSpec((Oc, 1), lambda n: (0, 0)),
        ],
        out_specs=(
            pl.BlockSpec((B * O, HW), lambda n: (n, 0)),
            pl.BlockSpec((1, Oc, 2), lambda n: (n, 0, 0)),
        ),
        compiler_params=cparams,
    )(patches, wt, bvec)

    # ---- global BN statistics (training mode, biased variance) -------------
    cnt = float(N * HW)
    s = jnp.sum(stats[:, :O, 0], axis=0)
    ss = jnp.sum(stats[:, :O, 1], axis=0)
    mean_nb = s / cnt                                   # bias-free mean
    var = jnp.maximum(ss / cnt - mean_nb * mean_nb, 0.0)
    g_inv = gamma.astype(jnp.float32) * lax.rsqrt(var + eps)
    mean = mean_nb + bias.astype(jnp.float32)
    scale_rows = jnp.tile(g_inv, N).reshape(N * O, 1)
    shift_rows = jnp.tile(beta.astype(jnp.float32) - mean * g_inv,
                          N).reshape(N * O, 1)

    # ---- Phase 2: apply folded BN scale/shift (lane-dense elementwise) -----
    alias = {0: 0} if pre_dtype == jnp.float32 else {}
    out_flat = pl.pallas_call(
        _bn_apply_kernel,
        out_shape=jax.ShapeDtypeStruct((N * O, HW), jnp.float32),
        grid=(G,),
        in_specs=[
            pl.BlockSpec((B * O, HW), lambda n: (n, 0)),
            pl.BlockSpec((B * O, 1), lambda n: (n, 0)),
            pl.BlockSpec((B * O, 1), lambda n: (n, 0)),
        ],
        out_specs=pl.BlockSpec((B * O, HW), lambda n: (n, 0)),
        compiler_params=cparams,
        input_output_aliases=alias,
    )(pre, scale_rows, shift_rows)

    out_nchw = out_flat.reshape(N, O, H, W)   # free reshape, already NCHW
    return out_nchw, binary_mask_n1hw


def _reference(x_nchw, mask, w_hwio, bias, gamma, beta, scale=9.0, eps=1e-5):
    """Pure-JAX reference mirroring the PyTorch forward (training-mode BN)."""
    O = w_hwio.shape[-1]
    feat = x_nchw * mask
    conv = lax.conv_general_dilated(
        feat, w_hwio, (1, 1), 'SAME',
        dimension_numbers=('NCHW', 'HWIO', 'NCHW'))
    ones_w = jnp.ones((3, 3, 1, O), jnp.float32)
    norm = lax.conv_general_dilated(
        mask, ones_w, (1, 1), 'SAME',
        dimension_numbers=('NCHW', 'HWIO', 'NCHW'))
    norm = jnp.where(norm == 0.0, 0.0, 1.0 / jnp.where(norm == 0.0, 1.0, norm))
    pre = conv * norm * scale + bias.reshape(1, -1, 1, 1)
    mean = jnp.mean(pre, axis=(0, 2, 3), keepdims=True)
    var = jnp.mean((pre - mean) ** 2, axis=(0, 2, 3), keepdims=True)
    return (pre - mean) * lax.rsqrt(var + eps) * gamma.reshape(1, -1, 1, 1) \
        + beta.reshape(1, -1, 1, 1)


if __name__ == "__main__":
    key = jax.random.PRNGKey(0)
    k_x, k_m, k_w, k_b, k_g, k_be = jax.random.split(key, 6)

    N, C, O, H, W, K = 8, 4, 8, 16, 16, 3
    SCALE = 9.0

    x = jax.random.normal(k_x, (N, C, H, W), dtype=jnp.float32)
    # non-trivial binary mask (sparse-conv use case)
    binary_mask = (jax.random.uniform(k_m, (N, 1, H, W)) < 0.7).astype(jnp.float32)

    # feature_conv: kaiming_normal_(mode='fan_out', nonlinearity='relu')
    fan_out = O * K * K
    std = (2.0 / fan_out) ** 0.5
    w_hwio = jax.random.normal(k_w, (K, K, C, O), dtype=jnp.float32) * std
    bias = 0.1 * jax.random.normal(k_b, (O,), dtype=jnp.float32)
    gamma = 1.0 + 0.1 * jax.random.normal(k_g, (O,), dtype=jnp.float32)
    beta = 0.1 * jax.random.normal(k_be, (O,), dtype=jnp.float32)

    ref = jax.block_until_ready(
        _reference(x, binary_mask, w_hwio, bias, gamma, beta, scale=SCALE))

    # --- f32 MXU path: strict numerical check --------------------------------
    fwd32 = jax.jit(functools.partial(
        sparse_scaled_bn_conv2d, scale=SCALE, block_b=4, use_bf16=False))
    out32, mask_out = fwd32(x, binary_mask, w_hwio, bias, gamma, beta)
    out32 = jax.block_until_ready(out32)
    assert out32.shape == (N, O, H, W)
    assert mask_out.shape == (N, 1, H, W)
    err32 = float(jnp.max(jnp.abs(out32 - ref)))
    assert jnp.allclose(out32, ref, atol=1e-4, rtol=1e-4), f"f32 max err {err32}"

    # --- bf16 MXU / bf16 inter-phase path (default): loose sanity check ------
    fwd16 = jax.jit(functools.partial(
        sparse_scaled_bn_conv2d, scale=SCALE, block_b=4, use_bf16=True))
    out16, _ = fwd16(x, binary_mask, w_hwio, bias, gamma, beta)
    out16 = jax.block_until_ready(out16)
    err16 = float(jnp.max(jnp.abs(out16 - ref)))
    assert err16 < 0.25, f"bf16 max err {err16}"

    print("KERNEL_OK")
</pallas_src>

<mosaic_0001>
module attributes {stable_mosaic.version = 11 : i64} {
  func.func @_conv_stats_kernel(%arg0: i32, %arg1: memref<128x1024xf32, #tpu.memory_space<vmem>>, %arg2: memref<128x128xf32, #tpu.memory_space<vmem>>, %arg3: memref<128x1xf32, #tpu.memory_space<vmem>>, %arg4: memref<32x256xf32, #tpu.memory_space<vmem>>, %arg5: memref<1x128x2xf32, #tpu.memory_space<vmem>>) attributes {dimension_semantics = [#tpu.dimension_semantics<parallel>], iteration_bounds = array<i64: 2>, scalar_prefetch = 0 : i64, scratch_operands = 0 : i64, tpu.core_type = #tpu.core_type<tc>, window_params = [{transform_indices = @transform_0, window_bounds = array<i64: 128, 1024>}, {pipeline_mode = #tpu.pipeline_mode<synchronous>, transform_indices = @transform_1, window_bounds = array<i64: 128, 128>}, {pipeline_mode = #tpu.pipeline_mode<synchronous>, transform_indices = @transform_2, window_bounds = array<i64: 128, 1>}, {transform_indices = @transform_3, window_bounds = array<i64: 32, 256>}, {transform_indices = @transform_4, window_bounds = array<i64: 1, 128, 2>}]} {
    %c0 = arith.constant 0 : index
    %c0_0 = arith.constant 0 : index
    %0 = vector.load %arg2[%c0, %c0_0] : memref<128x128xf32, #tpu.memory_space<vmem>>, vector<128x128xf32>
    %c0_1 = arith.constant 0 : index
    %c0_2 = arith.constant 0 : index
    %1 = vector.load %arg1[%c0_1, %c0_2] : memref<128x1024xf32, #tpu.memory_space<vmem>>, vector<128x1024xf32>
    %cst = arith.constant dense<0.000000e+00> : vector<128x1024xf32>
    %2 = tpu.matmul %0, %1, %cst {dimension_numbers = #tpu.dot_dimension_numbers<[1], [0], [0], [1], [0, 0, 1, 1], [], []>} : vector<128x128xf32>, vector<128x1024xf32>, vector<128x1024xf32> -> vector<128x1024xf32>
    %3 = vector.extract_strided_slice %2 {offsets = [8, 0], sizes = [1, 1024], strides = [1, 1]} : vector<128x1024xf32> to vector<1x1024xf32>
    %cst_3 = arith.constant 0.000000e+00 : f32
    %4 = vector.broadcast %cst_3 : f32 to vector<1x1024xf32>
    %5 = arith.cmpf oeq, %3, %4 : vector<1x1024xf32>
    %cst_4 = arith.constant 0.000000e+00 : f32
    %6 = vector.broadcast %cst_4 : f32 to vector<1x1024xf32>
    %7 = arith.cmpf oeq, %3, %6 : vector<1x1024xf32>
    %cst_5 = arith.constant 1.000000e+00 : f32
    %8 = vector.broadcast %cst_5 : f32 to vector<1x1024xf32>
    %9 = arith.select %7, %8, %3 : vector<1x1024xi1>, vector<1x1024xf32>
    %cst_6 = arith.constant 9.000000e+00 : f32
    %10 = vector.broadcast %cst_6 : f32 to vector<1x1024xf32>
    %11 = arith.divf %10, %9 : vector<1x1024xf32>
    %cst_7 = arith.constant 0.000000e+00 : f32
    %12 = vector.broadcast %cst_7 : f32 to vector<1x1024xf32>
    %13 = arith.select %5, %12, %11 : vector<1x1024xi1>, vector<1x1024xf32>
    %14 = vector.broadcast %13 : vector<1x1024xf32> to vector<128x1024xf32>
    %15 = arith.mulf %2, %14 : vector<128x1024xf32>
    %cst_8 = arith.constant dense<0.000000e+00> : vector<128xf32>
    %16 = vector.multi_reduction <add>, %15, %cst_8 [1] : vector<128x1024xf32> to vector<128xf32>
    %17 = vector.shape_cast %16 : vector<128xf32> to vector<128x1xf32>
    %18 = arith.mulf %15, %15 : vector<128x1024xf32>
    %cst_9 = arith.constant dense<0.000000e+00> : vector<128xf32>
    %19 = vector.multi_reduction <add>, %18, %cst_9 [1] : vector<128x1024xf32> to vector<128xf32>
    %20 = vector.shape_cast %19 : vector<128xf32> to vector<128x1xf32>
    %21 = tpu.concatenate %17, %20 in 1 : vector<128x1xf32>, vector<128x1xf32> -> vector<128x2xf32>
    %c0_10 = arith.constant 0 : index
    %c0_11 = arith.constant 0 : index
    %c0_12 = arith.constant 0 : index
    %22 = vector.load %arg5[%c0_10, %c0_11, %c0_12] : memref<1x128x2xf32, #tpu.memory_space<vmem>>, vector<1x128x2xf32>
    %23 = vector.shape_cast %22 : vector<1x128x2xf32> to vector<128x2xf32>
    %24 = vector.shape_cast %21 : vector<128x2xf32> to vector<1x128x2xf32>
    tpu.vector_store %arg5[%c0_10, %c0_11, %c0_12], %24 {strides = array<i32>} : memref<1x128x2xf32, #tpu.memory_space<vmem>>, vector<1x128x2xf32>,
    %c0_13 = arith.constant 0 : index
    %c0_14 = arith.constant 0 : index
    %25 = vector.load %arg3[%c0_13, %c0_14] : memref<128x1xf32, #tpu.memory_space<vmem>>, vector<128x1xf32>
    %26 = vector.broadcast %25 : vector<128x1xf32> to vector<128x1024xf32>
    %27 = arith.addf %15, %26 : vector<128x1024xf32>
    %28 = vector.extract_strided_slice %27 {offsets = [0, 0], sizes = [8, 256], strides = [1, 1]} : vector<128x1024xf32> to vector<8x256xf32>
    %29 = vector.extract_strided_slice %27 {offsets = [0, 256], sizes = [8, 256], strides = [1, 1]} : vector<128x1024xf32> to vector<8x256xf32>
    %30 = vector.extract_strided_slice %27 {offsets = [0, 512], sizes = [8, 256], strides = [1, 1]} : vector<128x1024xf32> to vector<8x256xf32>
    %31 = vector.extract_strided_slice %27 {offsets = [0, 768], sizes = [8, 256], strides = [1, 1]} : vector<128x1024xf32> to vector<8x256xf32>
    %32 = tpu.concatenate %28, %29, %30, %31 in 0 : vector<8x256xf32>, vector<8x256xf32>, vector<8x256xf32>, vector<8x256xf32> -> vector<32x256xf32>
    %c0_15 = arith.constant 0 : index
    %c0_16 = arith.constant 0 : index
    %33 = vector.load %arg4[%c0_15, %c0_16] : memref<32x256xf32, #tpu.memory_space<vmem>>, vector<32x256xf32>
    tpu.vector_store %arg4[%c0_15, %c0_16], %32 {strides = array<i32>} : memref<32x256xf32, #tpu.memory_space<vmem>>, vector<32x256xf32>,
    return
  }
  func.func @transform_0(%arg0: i32) -> (i32, i32) {
    %c0_i32 = arith.constant 0 : i32
    %c0_i32_0 = arith.constant 0 : i32
    return %c0_i32, %arg0 : i32, i32
  }
  func.func @transform_1(%arg0: i32) -> (i32, i32) {
    %c0_i32 = arith.constant 0 : i32
    %c0_i32_0 = arith.constant 0 : i32
    %c0_i32_1 = arith.constant 0 : i32
    return %c0_i32, %c0_i32_0 : i32, i32
  }
  func.func @transform_2(%arg0: i32) -> (i32, i32) {
    %c0_i32 = arith.constant 0 : i32
    %c0_i32_0 = arith.constant 0 : i32
    %c0_i32_1 = arith.constant 0 : i32
    return %c0_i32, %c0_i32_0 : i32, i32
  }
  func.func @transform_3(%arg0: i32) -> (i32, i32) {
    %c0_i32 = arith.constant 0 : i32
    %c0_i32_0 = arith.constant 0 : i32
    return %arg0, %c0_i32 : i32, i32
  }
  func.func @transform_4(%arg0: i32) -> (i32, i32, i32) {
    %c0_i32 = arith.constant 0 : i32
    %c0_i32_0 = arith.constant 0 : i32
    %c0_i32_1 = arith.constant 0 : i32
    return %arg0, %c0_i32, %c0_i32_0 : i32, i32, i32
  }
}

module attributes {stable_mosaic.version = 11 : i64} {
  func.func @_bn_apply_kernel(%arg0: i32, %arg1: memref<32x256xf32, #tpu.memory_space<vmem>>, %arg2: memref<32x1xf32, #tpu.memory_space<vmem>>, %arg3: memref<32x1xf32, #tpu.memory_space<vmem>>, %arg4: memref<32x256xf32, #tpu.memory_space<vmem>>) attributes {dimension_semantics = [#tpu.dimension_semantics<parallel>], iteration_bounds = array<i64: 2>, scalar_prefetch = 0 : i64, scratch_operands = 0 : i64, tpu.core_type = #tpu.core_type<tc>, window_params = [{transform_indices = @transform_0, window_bounds = array<i64: 32, 256>}, {transform_indices = @transform_1, window_bounds = array<i64: 32, 1>}, {transform_indices = @transform_2, window_bounds = array<i64: 32, 1>}, {transform_indices = @transform_3, window_bounds = array<i64: 32, 256>}]} {
    %c0 = arith.constant 0 : index
    %c0_0 = arith.constant 0 : index
    %0 = vector.load %arg1[%c0, %c0_0] : memref<32x256xf32, #tpu.memory_space<vmem>>, vector<32x256xf32>
    %c0_1 = arith.constant 0 : index
    %c0_2 = arith.constant 0 : index
    %1 = vector.load %arg2[%c0_1, %c0_2] : memref<32x1xf32, #tpu.memory_space<vmem>>, vector<32x1xf32>
    %2 = vector.broadcast %1 : vector<32x1xf32> to vector<32x256xf32>
    %3 = arith.mulf %0, %2 : vector<32x256xf32>
    %c0_3 = arith.constant 0 : index
    %c0_4 = arith.constant 0 : index
    %4 = vector.load %arg3[%c0_3, %c0_4] : memref<32x1xf32, #tpu.memory_space<vmem>>, vector<32x1xf32>
    %5 = vector.broadcast %4 : vector<32x1xf32> to vector<32x256xf32>
    %6 = arith.addf %3, %5 : vector<32x256xf32>
    %c0_5 = arith.constant 0 : index
    %c0_6 = arith.constant 0 : index
    %7 = vector.load %arg4[%c0_5, %c0_6] : memref<32x256xf32, #tpu.memory_space<vmem>>, vector<32x256xf32>
    tpu.vector_store %arg4[%c0_5, %c0_6], %6 {strides = array<i32>} : memref<32x256xf32, #tpu.memory_space<vmem>>, vector<32x256xf32>,
    return
  }
  func.func @transform_0(%arg0: i32) -> (i32, i32) {
    %c0_i32 = arith.constant 0 : i32
    %c0_i32_0 = arith.constant 0 : i32
    return %arg0, %c0_i32 : i32, i32
  }
  func.func @transform_1(%arg0: i32) -> (i32, i32) {
    %c0_i32 = arith.constant 0 : i32
    %c0_i32_0 = arith.constant 0 : i32
    return %arg0, %c0_i32 : i32, i32
  }
  func.func @transform_2(%arg0: i32) -> (i32, i32) {
    %c0_i32 = arith.constant 0 : i32
    %c0_i32_0 = arith.constant 0 : i32
    return %arg0, %c0_i32 : i32, i32
  }
  func.func @transform_3(%arg0: i32) -> (i32, i32) {
    %c0_i32 = arith.constant 0 : i32
    %c0_i32_0 = arith.constant 0 : i32
    return %arg0, %c0_i32 : i32, i32
  }
}

</mosaic_0001>

<llo_original>
// kernel: tile.13
$region0: #{tile.13}
  #allocation0 [shape = 's32[1]{0}', space=sflag, size = 0x4, scoped, tag = 'scoped memory for tile.13']
  %s0 = inlined_call_operand.vmem [shape: f32[8], index: 0, kind: input, shape index: {}]
  %s1 = inlined_call_operand.vmem [shape: f32[8,8], index: 1, kind: output, shape index: {}]
  // Predicated region
  $region2: #{tile.13} parent=0 // pred_check
    _
  $region3: #{tile.13} parent=0 // pred_check_branch
    %3 = sbr.rel (0) target = $region5
  $region4: #{tile.13} parent=0 // pred_region
    _
  $region5: #{tile.13} parent=0 // pred_fallthru
    _
  %v4 = vld [vmem:[%s0] ss:$0 sm:$0xff]
  %5 = vst [vmem:[%s1] sm:$0xff] %v4

// kernel: tile.0
$region0: #{tile.0}
  %s0 = inlined_call_operand.vmem [shape: f32[8,8], index: 0, kind: input, shape index: {}]
  %s1 = inlined_call_operand.vmem [shape: f32[64,1], index: 1, kind: output, shape index: {}]
  %v2 = vld [vmem:[%s0] sm:$0xff]
  %vm3 = vcmask 7168
  %4 = vst.msk [vmem:[%s1] ss:$8 sm:$0xf] %vm3, %v2
  %5 = vst.msk [vmem:[%s1] ss:$8 sm:$0xf0] %vm3, %v2
  %v6 = vld [vmem:[%s0] sm:$0xff]
  %7 = vrot.lane.b32.xlu0 %v6, 127
  %v8 = vpop.permute.xlu0 %7
  %vm9 = vcmask 7168
  %s10 = scalar_lea.vmem %s1, 1
  %11 = vst.msk [vmem:[%s10] ss:$8 sm:$0xf] %vm9, %v8
  %s12 = scalar_lea.vmem %s1, 1
  %13 = vst.msk [vmem:[%s12] ss:$8 sm:$0xf0] %vm9, %v8
  %v14 = vld [vmem:[%s0] sm:$0xff]
  %15 = vrot.lane.b32.xlu0 %v14, 126
  %v16 = vpop.permute.xlu0 %15
  %vm17 = vcmask 7168
  %s18 = scalar_lea.vmem %s1, 2
  %19 = vst.msk [vmem:[%s18] ss:$8 sm:$0xf] %vm17, %v16
  %s20 = scalar_lea.vmem %s1, 2
  %21 = vst.msk [vmem:[%s20] ss:$8 sm:$0xf0] %vm17, %v16
  %v22 = vld [vmem:[%s0] sm:$0xff]
  %23 = vrot.lane.b32.xlu0 %v22, 125
  %v24 = vpop.permute.xlu0 %23
  %vm25 = vcmask 7168
  %s26 = scalar_lea.vmem %s1, 3
  %27 = vst.msk [vmem:[%s26] ss:$8 sm:$0xf] %vm25, %v24
  %s28 = scalar_lea.vmem %s1, 3
  %29 = vst.msk [vmem:[%s28] ss:$8 sm:$0xf0] %vm25, %v24
  %v30 = vld [vmem:[%s0] sm:$0xff]
  %31 = vrot.lane.b32.xlu0 %v30, 124
  %v32 = vpop.permute.xlu0 %31
  %vm33 = vcmask 7168
  %s34 = scalar_lea.vmem %s1, 4
  %35 = vst.msk [vmem:[%s34] ss:$8 sm:$0xf] %vm33, %v32
  %s36 = scalar_lea.vmem %s1, 4
  %37 = vst.msk [vmem:[%s36] ss:$8 sm:$0xf0] %vm33, %v32
  %v38 = vld [vmem:[%s0] sm:$0xff]
  %39 = vrot.lane.b32.xlu0 %v38, 123
  %v40 = vpop.permute.xlu0 %39
  %vm41 = vcmask 7168
  %s42 = scalar_lea.vmem %s1, 5
  %43 = vst.msk [vmem:[%s42] ss:$8 sm:$0xf] %vm41, %v40
  %s44 = scalar_lea.vmem %s1, 5
  %45 = vst.msk [vmem:[%s44] ss:$8 sm:$0xf0] %vm41, %v40
  %v46 = vld [vmem:[%s0] sm:$0xff]
  %47 = vrot.lane.b32.xlu0 %v46, 122
  %v48 = vpop.permute.xlu0 %47
  %vm49 = vcmask 7168
  %s50 = scalar_lea.vmem %s1, 6
  %51 = vst.msk [vmem:[%s50] ss:$8 sm:$0xf] %vm49, %v48
  %s52 = scalar_lea.vmem %s1, 6
  %53 = vst.msk [vmem:[%s52] ss:$8 sm:$0xf0] %vm49, %v48
  %v54 = vld [vmem:[%s0] sm:$0xff]
  %55 = vrot.lane.b32.xlu0 %v54, 121
  %v56 = vpop.permute.xlu0 %55
  %vm57 = vcmask 7168
  %s58 = scalar_lea.vmem %s1, 7
  %59 = vst.msk [vmem:[%s58] ss:$8 sm:$0xf] %vm57, %v56
  %s60 = scalar_lea.vmem %s1, 7
  %61 = vst.msk [vmem:[%s60] ss:$8 sm:$0xf0] %vm57, %v56

// kernel: sparse_scaled_bn_conv2d.3
$region0: #{sparse_scaled_bn_conv2d.3}
  #allocation0 [shape = 'u32[]', space=smem, size = 0x4, offset = 0x4, fixed_abs, tag = 'smem constant byte address 0x4 - core index']
  #allocation1 [shape = 'u32[144,128]{1,0:T(1,128)}', space=vmem, size = 0x12000, scoped, tag = 'internal scratch']
  %s0 = inlined_call_operand.vmem [shape: f32[64,256], index: 0, kind: input, shape index: {}, may-alias: {0,3}]
  %s1 = inlined_call_operand.vmem [shape: f32[64,1], index: 1, kind: input, shape index: {}]
  %s2 = inlined_call_operand.vmem [shape: f32[64,1], index: 2, kind: input, shape index: {}]
  %s3 = inlined_call_operand.vmem [shape: f32[64,256], index: 3, kind: output, shape index: {}, may-alias: {0,3}]
  %s4 = sld [smem:[#allocation0]]
  $region45: #{sparse_scaled_bn_conv2d.3} parent=0
    _
  %s6 = ssub.s32 1, %s4
  %s7 = scalar_select 0, %s6, %s4
  loop: start=0, step=1, limit=4
  $region2: #{sparse_scaled_bn_conv2d.3} parent=0 // loop_pre_header
    _
  $region3: #{sparse_scaled_bn_conv2d.3} parent=0 // loop_header
    %s9 = sphi 0, %s13
    %p10 = scmp.ge.s32.totalorder %s9, 4
    %s19 = sphi 0, %s21
    %s22 = sphi 0, %s19
    %s23 = sphi 0, %s22
    %s39 = sphi 0, %s23
    %s45 = sphi 0, %s47
    %s48 = sphi 0, %s45
    %s49 = sphi 0, %s48
    %s65 = sphi 0, %s49
    %s71 = sphi 0, %s73
    %s74 = sphi 0, %s71
    %s75 = sphi 0, %s74
    %s91 = sphi 0, %s75
    %s97 = sphi 0, %s99
    %s100 = sphi 0, %s97
    %s101 = sphi 0, %s100
    %s117 = sphi 0, %s101
  $region4: #{sparse_scaled_bn_conv2d.3} parent=0 // loop_header_branch
    %12 = sbr.rel (%p10) target = $region8
  $region5: #{sparse_scaled_bn_conv2d.3} parent=0 // loop_body
    %s14 = ssub.s32 %s9, 1
    %s15 = ssub.s32 %s9, 2
    %s16 = sadd.s32 %s9, 1
    %s17 = ssub.s32 %s9, %s16
    %p18 = scmp.eq.s32.totalorder %s17, 0
    %s20 = sadd.s32 %s19, 1
    %s21 = scalar_select %p18, %s19, %s20
    %p24 = pneg %p18
    %p25 = scmp.eq.s32.totalorder %s9, 1
    %p26 = por %p24, %p25
    %p27 = scmp.ne.s32.totalorder %s19, %s22
    %p28 = scmp.eq.s32.totalorder %s9, 0
    %p29 = por %p27, %p28
    %p30 = scmp.ne.s32.totalorder %s19, %s22
    %p31 = scmp.eq.s32.totalorder %s14, 1
    %p32 = por %p30, %p31
    %p33 = scmp.ne.s32.totalorder %s22, %s23
    %p34 = scmp.eq.s32.totalorder %s14, 0
    %p35 = por %p33, %p34
    %p36 = scmp.ne.s32.totalorder %s22, %s23
    %p37 = scmp.eq.s32.totalorder %s15, 1
    %p38 = por %p36, %p37
    %p40 = scmp.ne.s32.totalorder %s23, %s39
    %p41 = scmp.eq.s32.totalorder %s15, 0
    %p42 = por %p40, %p41
    %s43 = ssub.s32 %s9, %s16
    %p44 = scmp.eq.s32.totalorder %s43, 0
    %s46 = sadd.s32 %s45, 1
    %s47 = scalar_select %p44, %s45, %s46
    %p50 = pneg %p44
    %p51 = scmp.eq.s32.totalorder %s9, 1
    %p52 = por %p50, %p51
    %p53 = scmp.ne.s32.totalorder %s45, %s48
    %p54 = scmp.eq.s32.totalorder %s9, 0
    %p55 = por %p53, %p54
    %p56 = scmp.ne.s32.totalorder %s45, %s48
    %p57 = scmp.eq.s32.totalorder %s14, 1
    %p58 = por %p56, %p57
    %p59 = scmp.ne.s32.totalorder %s48, %s49
    %p60 = scmp.eq.s32.totalorder %s14, 0
    %p61 = por %p59, %p60
    %p62 = scmp.ne.s32.totalorder %s48, %s49
    %p63 = scmp.eq.s32.totalorder %s15, 1
    %p64 = por %p62, %p63
    %p66 = scmp.ne.s32.totalorder %s49, %s65
    %p67 = scmp.eq.s32.totalorder %s15, 0
    %p68 = por %p66, %p67
    %s69 = ssub.s32 %s9, %s16
    %p70 = scmp.eq.s32.totalorder %s69, 0
    %s72 = sadd.s32 %s71, 1
    %s73 = scalar_select %p70, %s71, %s72
    %p76 = pneg %p70
    %p77 = scmp.eq.s32.totalorder %s9, 1
    %p78 = por %p76, %p77
    %p79 = scmp.ne.s32.totalorder %s71, %s74
    %p80 = scmp.eq.s32.totalorder %s9, 0
    %p81 = por %p79, %p80
    %p82 = scmp.ne.s32.totalorder %s71, %s74
    %p83 = scmp.eq.s32.totalorder %s14, 1
    %p84 = por %p82, %p83
    %p85 = scmp.ne.s32.totalorder %s74, %s75
    %p86 = scmp.eq.s32.totalorder %s14, 0
    %p87 = por %p85, %p86
    %p88 = scmp.ne.s32.totalorder %s74, %s75
    %p89 = scmp.eq.s32.totalorder %s15, 1
    %p90 = por %p88, %p89
    %p92 = scmp.ne.s32.totalorder %s75, %s91
    %p93 = scmp.eq.s32.totalorder %s15, 0
    %p94 = por %p92, %p93
    %s95 = ssub.s32 %s9, %s16
    %p96 = scmp.eq.s32.totalorder %s95, 0
    %s98 = sadd.s32 %s97, 1
    %s99 = scalar_select %p96, %s97, %s98
    %p102 = pneg %p96
    %p103 = scmp.eq.s32.totalorder %s9, 1
    %p104 = por %p102, %p103
    %p105 = scmp.ne.s32.totalorder %s97, %s100
    %p106 = scmp.eq.s32.totalorder %s9, 0
    %p107 = por %p105, %p106
    %p108 = scmp.ne.s32.totalorder %s97, %s100
    %p109 = scmp.eq.s32.totalorder %s14, 1
    %p110 = por %p108, %p109
    %p111 = scmp.ne.s32.totalorder %s100, %s101
    %p112 = scmp.eq.s32.totalorder %s14, 0
    %p113 = por %p111, %p112
    %p114 = scmp.ne.s32.totalorder %s100, %s101
    %p115 = scmp.eq.s32.totalorder %s15, 1
    %p116 = por %p114, %p115
    %p118 = scmp.ne.s32.totalorder %s101, %s117
    %p119 = scmp.eq.s32.totalorder %s15, 0
    %p120 = por %p118, %p119
    %p121 = scmp.le.s32.totalorder 1, %s9
    %p122 = scmp.lt.s32.totalorder %s9, 3
    %p123 = pnand %p121, %p122
    %p124 = pneg %p123
    // Predicated region
    $region9: #{sparse_scaled_bn_conv2d.3} parent=5 // pred_check
      _
    $region10: #{sparse_scaled_bn_conv2d.3} parent=5 // pred_check_branch
      %126 = sbr.rel (%p123) target = $region12
    $region11: #{sparse_scaled_bn_conv2d.3} parent=5 // pred_region
      %s127 = ssub.s32 %s9, 1
    $region12: #{sparse_scaled_bn_conv2d.3} parent=5 // pred_fallthru
      _
    %p128 = scmp.lt.s32.totalorder %s9, 2
    // Predicated region
    $region13: #{sparse_scaled_bn_conv2d.3} parent=5 // pred_check
      %p129 = pneg %p128
    $region14: #{sparse_scaled_bn_conv2d.3} parent=5 // pred_check_branch
      %131 = sbr.rel (%p129) target = $region16
    $region15: #{sparse_scaled_bn_conv2d.3} parent=5 // pred_region
      // Predicated region
      $region17: #{sparse_scaled_bn_conv2d.3} parent=15 // pred_check
        %p132 = pneg %p29
      $region18: #{sparse_scaled_bn_conv2d.3} parent=15 // pred_check_branch
        %134 = sbr.rel (%p132) target = $region20
      $region19: #{sparse_scaled_bn_conv2d.3} parent=15 // pred_region
        %s135 = smul.u32 4, %s9
        %p136 = scmp.lt.s32.totalorder %s135, 7
        %s137 = scalar_select %p136, %s135, 7
        %s138 = smul.addr %s137, 2
        %s139 = smul.addr %s138, 8
        %s140 = scalar_lea.vmem %s0, %s139
        %s141 = smul.u32 4, %s9
      $region20: #{sparse_scaled_bn_conv2d.3} parent=15 // pred_fallthru
        _
      // Predicated region
      $region21: #{sparse_scaled_bn_conv2d.3} parent=15 // pred_check
        %p142 = pneg %p55
      $region22: #{sparse_scaled_bn_conv2d.3} parent=15 // pred_check_branch
        %144 = sbr.rel (%p142) target = $region24
      $region23: #{sparse_scaled_bn_conv2d.3} parent=15 // pred_region
        %s145 = smul.u32 4, %s9
        %p146 = scmp.lt.s32.totalorder %s145, 7
        %s147 = scalar_select %p146, %s145, 7
        %s148 = smul.addr %s147, 8
        %s149 = scalar_lea.vmem %s1, %s148
        %s150 = smul.u32 4, %s9
      $region24: #{sparse_scaled_bn_conv2d.3} parent=15 // pred_fallthru
        _
      // Predicated region
      $region25: #{sparse_scaled_bn_conv2d.3} parent=15 // pred_check
        %p151 = pneg %p81
      $region26: #{sparse_scaled_bn_conv2d.3} parent=15 // pred_check_branch
        %153 = sbr.rel (%p151) target = $region28
      $region27: #{sparse_scaled_bn_conv2d.3} parent=15 // pred_region
        %s154 = smul.u32 4, %s9
        %p155 = scmp.lt.s32.totalorder %s154, 7
        %s156 = scalar_select %p155, %s154, 7
        %s157 = smul.addr %s156, 8
        %s158 = scalar_lea.vmem %s2, %s157
        %s159 = smul.u32 4, %s9
      $region28: #{sparse_scaled_bn_conv2d.3} parent=15 // pred_fallthru
        _
    $region16: #{sparse_scaled_bn_conv2d.3} parent=5 // pred_fallthru
      _
    %p160 = scmp.le.s32.totalorder 1, %s9
    %p161 = scmp.lt.s32.totalorder %s9, 3
    %p162 = pnand %p160, %p161
    %p163 = pneg %p162
    // Predicated region
    $region29: #{sparse_scaled_bn_conv2d.3} parent=5 // pred_check
      _
    $region30: #{sparse_scaled_bn_conv2d.3} parent=5 // pred_check_branch
      %165 = sbr.rel (%p162) target = $region32
    $region31: #{sparse_scaled_bn_conv2d.3} parent=5 // pred_region
      %s166 = ssub.s32 %s9, 1
      %s167 = smul.u32 4, %s14
      %p168 = scmp.lt.s32.totalorder %s167, 7
      %s169 = scalar_select %p168, %s167, 7
      %s170 = smul.addr %s169, 2
      %s171 = smul.addr %s170, 8
      %s172 = scalar_lea.vmem %s0, %s171
      %p173 = pneg %p35
      %p174 = pneg %p32
      %s175 = smul.u32 4, %s14
      %p176 = scmp.lt.s32.totalorder %s175, 7
      %s177 = scalar_select %p176, %s175, 7
      %s178 = smul.addr %s177, 8
      %s179 = scalar_lea.vmem %s1, %s178
      %p180 = pneg %p61
      %p181 = pneg %p58
      %s182 = smul.u32 4, %s14
      %p183 = scmp.lt.s32.totalorder %s182, 7
      %s184 = scalar_select %p183, %s182, 7
      %s185 = smul.addr %s184, 8
      %s186 = scalar_lea.vmem %s2, %s185
      %p187 = pneg %p87
      %p188 = pneg %p84
      %p189 = pneg %p113
      %p190 = pneg %p110
      %s191 = smul.u32 4, %s14
      %p192 = scmp.lt.s32.totalorder %s191, 7
      %s193 = scalar_select %p192, %s191, 7
      %s194 = smul.addr %s193, 2
      %s195 = smul.addr %s194, 8
      %s196 = scalar_lea.vmem %s3, %s195
      %s197 = smul.u32 4, %s14
      %p198 = scmp.lt.s32.totalorder %s197, 7
      %s199 = scalar_select %p198, %s197, 7
      %s200 = smul.addr %s199, 2
      %s201 = smul.addr %s200, 8
      %s202 = scalar_lea.vmem %s0, %s201
      %s203 = smul.u32 4, %s14
      %s204 = smul.u32 4, %s14
      %p205 = scmp.lt.s32.totalorder %s204, 7
      %s206 = scalar_select %p205, %s204, 7
      %s207 = smul.addr %s206, 8
      %s208 = scalar_lea.vmem %s1, %s207
      %s209 = smul.u32 4, %s14
      %s210 = smul.u32 4, %s14
      %p211 = scmp.lt.s32.totalorder %s210, 7
      %s212 = scalar_select %p211, %s210, 7
      %s213 = smul.addr %s212, 8
      %s214 = scalar_lea.vmem %s2, %s213
      %s215 = smul.u32 4, %s14
      %s216 = smul.u32 4, %s14
      %p217 = scmp.lt.s32.totalorder %s216, 7
      %s218 = scalar_select %p217, %s216, 7
      %s219 = smul.addr %s218, 2
      %s220 = smul.addr %s219, 8
      %s221 = scalar_lea.vmem %s3, %s220
      %s222 = smul.u32 4, %s14
      %v223 = vld [vmem:[%s202] sm:$0xff]
      %v224 = vld [vmem:[%s202 + $0x8] sm:$0xff]
      %v225 = vld [vmem:[%s202 + $0x10] sm:$0xff]
      %v226 = vld [vmem:[%s202 + $0x18] sm:$0xff]
      %v227 = vld [vmem:[%s202 + $0x20] sm:$0xff]
      %v228 = vld [vmem:[%s202 + $0x28] sm:$0xff]
      %v229 = vld [vmem:[%s202 + $0x30] sm:$0xff]
      %v230 = vld [vmem:[%s202 + $0x38] sm:$0xff]
      %v231 = vld [vmem:[%s208] sm:$0xff]
      %v232 = vld [vmem:[%s208 + $0x8] sm:$0xff]
      %v233 = vld [vmem:[%s208 + $0x10] sm:$0xff]
      %v234 = vld [vmem:[%s208 + $0x18] sm:$0xff]
      %236 = vset.pattern.permute.xlu0 0
      %237 = vperm.xlu0 %236, %v231
      %v238 = vpop.permute.xlu0 %237
      %241 = vset.pattern.permute.xlu0 0
      %242 = vperm.xlu0 %241, %v232
      %v243 = vpop.permute.xlu0 %242
      %246 = vset.pattern.permute.xlu0 0
      %247 = vperm.xlu0 %246, %v233
      %v248 = vpop.permute.xlu0 %247
      %251 = vset.pattern.permute.xlu0 0
      %252 = vperm.xlu0 %251, %v234
      %v253 = vpop.permute.xlu0 %252
      %v255 = vmul.f32 %v223, %v238
      %v256 = vmul.f32 %v224, %v238
      %v257 = vmul.f32 %v225, %v243
      %v258 = vmul.f32 %v226, %v243
      %v259 = vmul.f32 %v227, %v248
      %v260 = vmul.f32 %v228, %v248
      %v261 = vmul.f32 %v229, %v253
      %v262 = vmul.f32 %v230, %v253
      %v263 = vld [vmem:[%s214] sm:$0xff]
      %v264 = vld [vmem:[%s214 + $0x8] sm:$0xff]
      %v265 = vld [vmem:[%s214 + $0x10] sm:$0xff]
      %v266 = vld [vmem:[%s214 + $0x18] sm:$0xff]
      %268 = vset.pattern.permute.xlu0 0
      %269 = vperm.xlu0 %268, %v263
      %v270 = vpop.permute.xlu0 %269
      %273 = vset.pattern.permute.xlu0 0
      %274 = vperm.xlu0 %273, %v264
      %v275 = vpop.permute.xlu0 %274
      %278 = vset.pattern.permute.xlu0 0
      %279 = vperm.xlu0 %278, %v265
      %v280 = vpop.permute.xlu0 %279
      %283 = vset.pattern.permute.xlu0 0
      %284 = vperm.xlu0 %283, %v266
      %v285 = vpop.permute.xlu0 %284
      %v287 = vadd.f32 %v255, %v270
      %v288 = vadd.f32 %v256, %v270
      %v289 = vadd.f32 %v257, %v275
      %v290 = vadd.f32 %v258, %v275
      %v291 = vadd.f32 %v259, %v280
      %v292 = vadd.f32 %v260, %v280
      %v293 = vadd.f32 %v261, %v285
      %v294 = vadd.f32 %v262, %v285
      %295 = vst [vmem:[%s221] sm:$0xff] %v287
      %296 = vst [vmem:[%s221 + $0x8] sm:$0xff] %v288
      %297 = vst [vmem:[%s221 + $0x10] sm:$0xff] %v289
      %298 = vst [vmem:[%s221 + $0x18] sm:$0xff] %v290
      %299 = vst [vmem:[%s221 + $0x20] sm:$0xff] %v291
      %300 = vst [vmem:[%s221 + $0x28] sm:$0xff] %v292
      %301 = vst [vmem:[%s221 + $0x30] sm:$0xff] %v293
      %302 = vst [vmem:[%s221 + $0x38] sm:$0xff] %v294
      %s303 = smul.u32 4, %s14
      %p304 = scmp.lt.s32.totalorder %s303, 7
      %s305 = scalar_select %p304, %s303, 7
      %s306 = smul.addr %s305, 2
      %s307 = smul.addr %s306, 8
      %s308 = scalar_lea.vmem %s3, %s307
      // Predicated region
      $region33: #{sparse_scaled_bn_conv2d.3} parent=31 // pred_check
        %p309 = pneg %p110
      $region34: #{sparse_scaled_bn_conv2d.3} parent=31 // pred_check_branch
        %311 = sbr.rel (%p309) target = $region36
      $region35: #{sparse_scaled_bn_conv2d.3} parent=31 // pred_region
        %s312 = smul.u32 4, %s14
      $region36: #{sparse_scaled_bn_conv2d.3} parent=31 // pred_fallthru
        _
    $region32: #{sparse_scaled_bn_conv2d.3} parent=5 // pred_fallthru
      _
    %p313 = scmp.le.s32.totalorder 2, %s9
    // Predicated region
    $region37: #{sparse_scaled_bn_conv2d.3} parent=5 // pred_check
      %p314 = pneg %p313
    $region38: #{sparse_scaled_bn_conv2d.3} parent=5 // pred_check_branch
      %316 = sbr.rel (%p314) target = $region40
    $region39: #{sparse_scaled_bn_conv2d.3} parent=5 // pred_region
      %s317 = ssub.s32 %s9, 2
      // Predicated region
      $region41: #{sparse_scaled_bn_conv2d.3} parent=39 // pred_check
        %p318 = pneg %p116
      $region42: #{sparse_scaled_bn_conv2d.3} parent=39 // pred_check_branch
        %320 = sbr.rel (%p318) target = $region44
      $region43: #{sparse_scaled_bn_conv2d.3} parent=39 // pred_region
        %s321 = smul.u32 4, %s15
        %p322 = scmp.lt.s32.totalorder %s321, 7
        %s323 = scalar_select %p322, %s321, 7
        %s324 = smul.addr %s323, 2
        %s325 = smul.addr %s324, 8
        %s326 = scalar_lea.vmem %s3, %s325
      $region44: #{sparse_scaled_bn_conv2d.3} parent=39 // pred_fallthru
        _
    $region40: #{sparse_scaled_bn_conv2d.3} parent=5 // pred_fallthru
      _
  $region6: #{sparse_scaled_bn_conv2d.3} parent=0 // loop_footer
    %s13 = sadd.s32 1, %s9
  $region7: #{sparse_scaled_bn_conv2d.3} parent=0 // loop_footer_branch
    %8 = sbr.rel target = $region3
  $region8: #{sparse_scaled_bn_conv2d.3} parent=0 // loop_exit
    _

// kernel: sparse_scaled_bn_conv2d.2
$region0: #{sparse_scaled_bn_conv2d.2}
  #allocation0 [shape = 'u32[]', space=smem, size = 0x4, offset = 0x4, fixed_abs, tag = 'smem constant byte address 0x4 - core index']
  #allocation1 [shape = 'u32[144,128]{1,0:T(1,128)}', space=vmem, size = 0x12000, scoped, tag = 'internal scratch']
  %s0 = inlined_call_operand.vmem [shape: f32[128,2048], index: 0, kind: input, shape index: {}]
  %s1 = inlined_call_operand.vmem [shape: f32[128,128], index: 1, kind: input, shape index: {}]
  %s2 = inlined_call_operand.vmem [shape: f32[128,1], index: 2, kind: input, shape index: {}]
  %s3 = inlined_call_operand.vmem [shape: f32[64,256], index: 3, kind: output, shape index: {0}]
  %s4 = inlined_call_operand.vmem [shape: f32[2,128,2], index: 4, kind: output, shape index: {1}]
  %5 = xla_tuple %s3, %s4
  %s6 = sld [smem:[#allocation0]]
  $region76: #{sparse_scaled_bn_conv2d.2} parent=0
    _
  %s8 = ssub.s32 1, %s6
  %s9 = scalar_select 0, %s8, %s6
  $region1: #{sparse_scaled_bn_conv2d.2} parent=0
    #allocation2 [shape = 'u8[1048576]{0}', space=vmem, size = 0x100000, scoped, tag = 'input window, operand 0']
    loop: start=0, step=1, limit=4
    $region2: #{sparse_scaled_bn_conv2d.2} parent=1 // loop_pre_header
      _
    $region3: #{sparse_scaled_bn_conv2d.2} parent=1 // loop_header
      %s11 = sphi 0, %s15
      %p12 = scmp.ge.s32.totalorder %s11, 4
      %s21 = sphi 0, %s23
      %s24 = sphi 0, %s21
      %s25 = sphi 0, %s24
      %s41 = sphi 0, %s25
      %s45 = sphi 0, %s45
      %s47 = sphi 0, %s45
      %s48 = sphi 0, %s47
      %s62 = sphi 0, %s48
      %s66 = sphi 0, %s66
      %s68 = sphi 0, %s66
      %s69 = sphi 0, %s68
      %s83 = sphi 0, %s69
      %s89 = sphi 0, %s91
      %s92 = sphi 0, %s89
      %s93 = sphi 0, %s92
      %s109 = sphi 0, %s93
      %s115 = sphi 0, %s117
      %s118 = sphi 0, %s115
      %s119 = sphi 0, %s118
      %s135 = sphi 0, %s119
    $region4: #{sparse_scaled_bn_conv2d.2} parent=1 // loop_header_branch
      %14 = sbr.rel (%p12) target = $region8
    $region5: #{sparse_scaled_bn_conv2d.2} parent=1 // loop_body
      %s16 = ssub.s32 %s11, 1
      %s17 = ssub.s32 %s11, 2
      %s18 = sadd.s32 %s11, 1
      %s19 = ssub.s32 %s11, %s18
      %p20 = scmp.eq.s32.totalorder %s19, 0
      %s22 = sadd.s32 %s21, 1
      %s23 = scalar_select %p20, %s21, %s22
      %p26 = pneg %p20
      %p27 = scmp.eq.s32.totalorder %s11, 1
      %p28 = por %p26, %p27
      %p29 = scmp.ne.s32.totalorder %s21, %s24
      %p30 = scmp.eq.s32.totalorder %s11, 0
      %p31 = por %p29, %p30
      %p32 = scmp.ne.s32.totalorder %s21, %s24
      %p33 = scmp.eq.s32.totalorder %s16, 1
      %p34 = por %p32, %p33
      %p35 = scmp.ne.s32.totalorder %s24, %s25
      %p36 = scmp.eq.s32.totalorder %s16, 0
      %p37 = por %p35, %p36
      %p38 = scmp.ne.s32.totalorder %s24, %s25
      %p39 = scmp.eq.s32.totalorder %s17, 1
      %p40 = por %p38, %p39
      %p42 = scmp.ne.s32.totalorder %s25, %s41
      %p43 = scmp.eq.s32.totalorder %s17, 0
      %p44 = por %p42, %p43
      %s46 = sadd.s32 %s45, 1
      %p49 = scmp.eq.s32.totalorder %s11, 1
      %p50 = scmp.ne.s32.totalorder %s45, %s47
      %p51 = scmp.eq.s32.totalorder %s11, 0
      %p52 = por %p50, %p51
      %p53 = scmp.ne.s32.totalorder %s45, %s47
      %p54 = scmp.eq.s32.totalorder %s16, 1
      %p55 = por %p53, %p54
      %p56 = scmp.ne.s32.totalorder %s47, %s48
      %p57 = scmp.eq.s32.totalorder %s16, 0
      %p58 = por %p56, %p57
      %p59 = scmp.ne.s32.totalorder %s47, %s48
      %p60 = scmp.eq.s32.totalorder %s17, 1
      %p61 = por %p59, %p60
      %p63 = scmp.ne.s32.totalorder %s48, %s62
      %p64 = scmp.eq.s32.totalorder %s17, 0
      %p65 = por %p63, %p64
      %s67 = sadd.s32 %s66, 1
      %p70 = scmp.eq.s32.totalorder %s11, 1
      %p71 = scmp.ne.s32.totalorder %s66, %s68
      %p72 = scmp.eq.s32.totalorder %s11, 0
      %p73 = por %p71, %p72
      %p74 = scmp.ne.s32.totalorder %s66, %s68
      %p75 = scmp.eq.s32.totalorder %s16, 1
      %p76 = por %p74, %p75
      %p77 = scmp.ne.s32.totalorder %s68, %s69
      %p78 = scmp.eq.s32.totalorder %s16, 0
      %p79 = por %p77, %p78
      %p80 = scmp.ne.s32.totalorder %s68, %s69
      %p81 = scmp.eq.s32.totalorder %s17, 1
      %p82 = por %p80, %p81
      %p84 = scmp.ne.s32.totalorder %s69, %s83
      %p85 = scmp.eq.s32.totalorder %s17, 0
      %p86 = por %p84, %p85
      %s87 = ssub.s32 %s11, %s18
      %p88 = scmp.eq.s32.totalorder %s87, 0
      %s90 = sadd.s32 %s89, 1
      %s91 = scalar_select %p88, %s89, %s90
      %p94 = pneg %p88
      %p95 = scmp.eq.s32.totalorder %s11, 1
      %p96 = por %p94, %p95
      %p97 = scmp.ne.s32.totalorder %s89, %s92
      %p98 = scmp.eq.s32.totalorder %s11, 0
      %p99 = por %p97, %p98
      %p100 = scmp.ne.s32.totalorder %s89, %s92
      %p101 = scmp.eq.s32.totalorder %s16, 1
      %p102 = por %p100, %p101
      %p103 = scmp.ne.s32.totalorder %s92, %s93
      %p104 = scmp.eq.s32.totalorder %s16, 0
      %p105 = por %p103, %p104
      %p106 = scmp.ne.s32.totalorder %s92, %s93
      %p107 = scmp.eq.s32.totalorder %s17, 1
      %p108 = por %p106, %p107
      %p110 = scmp.ne.s32.totalorder %s93, %s109
      %p111 = scmp.eq.s32.totalorder %s17, 0
      %p112 = por %p110, %p111
      %s113 = ssub.s32 %s11, %s18
      %p114 = scmp.eq.s32.totalorder %s113, 0
      %s116 = sadd.s32 %s115, 1
      %s117 = scalar_select %p114, %s115, %s116
      %p120 = pneg %p114
      %p121 = scmp.eq.s32.totalorder %s11, 1
      %p122 = por %p120, %p121
      %p123 = scmp.ne.s32.totalorder %s115, %s118
      %p124 = scmp.eq.s32.totalorder %s11, 0
      %p125 = por %p123, %p124
      %p126 = scmp.ne.s32.totalorder %s115, %s118
      %p127 = scmp.eq.s32.totalorder %s16, 1
      %p128 = por %p126, %p127
      %p129 = scmp.ne.s32.totalorder %s118, %s119
      %p130 = scmp.eq.s32.totalorder %s16, 0
      %p131 = por %p129, %p130
      %p132 = scmp.ne.s32.totalorder %s118, %s119
      %p133 = scmp.eq.s32.totalorder %s17, 1
      %p134 = por %p132, %p133
      %p136 = scmp.ne.s32.totalorder %s119, %s135
      %p137 = scmp.eq.s32.totalorder %s17, 0
      %p138 = por %p136, %p137
      %p139 = scmp.le.s32.totalorder 1, %s11
      %p140 = scmp.lt.s32.totalorder %s11, 3
      %p141 = pnand %p139, %p140
      %p142 = pneg %p141
      // Predicated region
      $region9: #{sparse_scaled_bn_conv2d.2} parent=5 // pred_check
        _
      $region10: #{sparse_scaled_bn_conv2d.2} parent=5 // pred_check_branch
        %144 = sbr.rel (%p141) target = $region12
      $region11: #{sparse_scaled_bn_conv2d.2} parent=5 // pred_region
        %s145 = ssub.s32 %s11, 1
        // Predicated region
        $region13: #{sparse_scaled_bn_conv2d.2} parent=11 // pred_check
          %p146 = pneg %p58
        $region14: #{sparse_scaled_bn_conv2d.2} parent=11 // pred_check_branch
          %148 = sbr.rel (%p146) target = $region16
        $region15: #{sparse_scaled_bn_conv2d.2} parent=11 // pred_region
          _
        $region16: #{sparse_scaled_bn_conv2d.2} parent=11 // pred_fallthru
          _
        // Predicated region
        $region17: #{sparse_scaled_bn_conv2d.2} parent=11 // pred_check
          %p149 = pneg %p79
        $region18: #{sparse_scaled_bn_conv2d.2} parent=11 // pred_check_branch
          %151 = sbr.rel (%p149) target = $region20
        $region19: #{sparse_scaled_bn_conv2d.2} parent=11 // pred_region
          _
        $region20: #{sparse_scaled_bn_conv2d.2} parent=11 // pred_fallthru
          _
      $region12: #{sparse_scaled_bn_conv2d.2} parent=5 // pred_fallthru
        _
      %p152 = scmp.lt.s32.totalorder %s11, 2
      // Predicated region
      $region21: #{sparse_scaled_bn_conv2d.2} parent=5 // pred_check
        %p153 = pneg %p152
      $region22: #{sparse_scaled_bn_conv2d.2} parent=5 // pred_check_branch
        %155 = sbr.rel (%p153) target = $region24
      $region23: #{sparse_scaled_bn_conv2d.2} parent=5 // pred_region
        // Predicated region
        $region25: #{sparse_scaled_bn_conv2d.2} parent=23 // pred_check
          %p156 = pneg %p31
        $region26: #{sparse_scaled_bn_conv2d.2} parent=23 // pred_check_branch
          %158 = sbr.rel (%p156) target = $region28
        $region27: #{sparse_scaled_bn_conv2d.2} parent=23 // pred_region
          %s159 = sand.u32 %s21, 1
          %s160 = sand.u32 %s21, 1
          %s161 = smul.addr %s160, 1024
          %s162 = scalar_lea.vmem [#allocation2], %s161
          %s163 = smul.u32 8, %s11
          %s164 = smul.addr %s163, 8
          %s165 = scalar_lea.vmem %s0, %s164
          // Predicated region
          $region29: #{sparse_scaled_bn_conv2d.2} parent=27 // pred_check
            _
          $region30: #{sparse_scaled_bn_conv2d.2} parent=27 // pred_check_branch
            %167 = sbr.rel (0) target = $region32
          $region31: #{sparse_scaled_bn_conv2d.2} parent=27 // pred_region
            // Predicated region
            $region33: #{sparse_scaled_bn_conv2d.2} parent=31 // pred_check
              _
            $region34: #{sparse_scaled_bn_conv2d.2} parent=31 // pred_check_branch
              %169 = sbr.rel (0) target = $region36
            $region35: #{sparse_scaled_bn_conv2d.2} parent=31 // pred_region
              loop: start=0, step=1, limit=1
              $region37: #{sparse_scaled_bn_conv2d.2} parent=35 // loop_pre_header
                _
              $region38: #{sparse_scaled_bn_conv2d.2} parent=35 // loop_header
                %s171 = sphi 0, %s175
                %p172 = scmp.ge.s32.totalorder %s171, 1
                %s176 = sphi %s165, %s165
                %s177 = sphi %s162, %s162
              $region39: #{sparse_scaled_bn_conv2d.2} parent=35 // loop_header_branch
                %174 = sbr.rel (%p172) target = $region43
              $region40: #{sparse_scaled_bn_conv2d.2} parent=35 // loop_body
                %v178 = vld [vmem:[%s176] sm:$0xff]
                %179 = vst [vmem:[%s177] sm:$0xff] %v178
                %v180 = vld [vmem:[%s176 + $0x8] sm:$0xff]
                %181 = vst [vmem:[%s177 + $0x8] sm:$0xff] %v180
                %v182 = vld [vmem:[%s176 + $0x10] sm:$0xff]
                %183 = vst [vmem:[%s177 + $0x10] sm:$0xff] %v182
                %v184 = vld [vmem:[%s176 + $0x18] sm:$0xff]
                %185 = vst [vmem:[%s177 + $0x18] sm:$0xff] %v184
                %v186 = vld [vmem:[%s176 + $0x20] sm:$0xff]
                %187 = vst [vmem:[%s177 + $0x20] sm:$0xff] %v186
                %v188 = vld [vmem:[%s176 + $0x28] sm:$0xff]
                %189 = vst [vmem:[%s177 + $0x28] sm:$0xff] %v188
                %v190 = vld [vmem:[%s176 + $0x30] sm:$0xff]
                %191 = vst [vmem:[%s177 + $0x30] sm:$0xff] %v190
                %v192 = vld [vmem:[%s176 + $0x38] sm:$0xff]
                %193 = vst [vmem:[%s177 + $0x38] sm:$0xff] %v192
                %v194 = vld [vmem:[%s176 + $0x80] sm:$0xff]
                %195 = vst [vmem:[%s177 + $0x40] sm:$0xff] %v194
                %v196 = vld [vmem:[%s176 + $0x88] sm:$0xff]
                %197 = vst [vmem:[%s177 + $0x48] sm:$0xff] %v196
                %v198 = vld [vmem:[%s176 + $0x90] sm:$0xff]
                %199 = vst [vmem:[%s177 + $0x50] sm:$0xff] %v198
                %v200 = vld [vmem:[%s176 + $0x98] sm:$0xff]
                %201 = vst [vmem:[%s177 + $0x58] sm:$0xff] %v200
                %v202 = vld [vmem:[%s176 + $0xa0] sm:$0xff]
                %203 = vst [vmem:[%s177 + $0x60] sm:$0xff] %v202
                %v204 = vld [vmem:[%s176 + $0xa8] sm:$0xff]
                %205 = vst [vmem:[%s177 + $0x68] sm:$0xff] %v204
                %v206 = vld [vmem:[%s176 + $0xb0] sm:$0xff]
                %207 = vst [vmem:[%s177 + $0x70] sm:$0xff] %v206
                %v208 = vld [vmem:[%s176 + $0xb8] sm:$0xff]
                %209 = vst [vmem:[%s177 + $0x78] sm:$0xff] %v208
                %v210 = vld [vmem:[%s176 + $0x100] sm:$0xff]
                %211 = vst [vmem:[%s177 + $0x80] sm:$0xff] %v210
                %v212 = vld [vmem:[%s176 + $0x108] sm:$0xff]
                %213 = vst [vmem:[%s177 + $0x88] sm:$0xff] %v212
                %v214 = vld [vmem:[%s176 + $0x110] sm:$0xff]
                %215 = vst [vmem:[%s177 + $0x90] sm:$0xff] %v214
                %v216 = vld [vmem:[%s176 + $0x118] sm:$0xff]
                %217 = vst [vmem:[%s177 + $0x98] sm:$0xff] %v216
                %v218 = vld [vmem:[%s176 + $0x120] sm:$0xff]
                %219 = vst [vmem:[%s177 + $0xa0] sm:$0xff] %v218
                %v220 = vld [vmem:[%s176 + $0x128] sm:$0xff]
                %221 = vst [vmem:[%s177 + $0xa8] sm:$0xff] %v220
                %v222 = vld [vmem:[%s176 + $0x130] sm:$0xff]
                %223 = vst [vmem:[%s177 + $0xb0] sm:$0xff] %v222
                %v224 = vld [vmem:[%s176 + $0x138] sm:$0xff]
                %225 = vst [vmem:[%s177 + $0xb8] sm:$0xff] %v224
                %v226 = vld [vmem:[%s176 + $0x180] sm:$0xff]
                %227 = vst [vmem:[%s177 + $0xc0] sm:$0xff] %v226
                %v228 = vld [vmem:[%s176 + $0x188] sm:$0xff]
                %229 = vst [vmem:[%s177 + $0xc8] sm:$0xff] %v228
                %v230 = vld [vmem:[%s176 + $0x190] sm:$0xff]
                %231 = vst [vmem:[%s177 + $0xd0] sm:$0xff] %v230
                %v232 = vld [vmem:[%s176 + $0x198] sm:$0xff]
                %233 = vst [vmem:[%s177 + $0xd8] sm:$0xff] %v232
                %v234 = vld [vmem:[%s176 + $0x1a0] sm:$0xff]
                %235 = vst [vmem:[%s177 + $0xe0] sm:$0xff] %v234
                %v236 = vld [vmem:[%s176 + $0x1a8] sm:$0xff]
                %237 = vst [vmem:[%s177 + $0xe8] sm:$0xff] %v236
                %v238 = vld [vmem:[%s176 + $0x1b0] sm:$0xff]
                %239 = vst [vmem:[%s177 + $0xf0] sm:$0xff] %v238
                %v240 = vld [vmem:[%s176 + $0x1b8] sm:$0xff]
                %241 = vst [vmem:[%s177 + $0xf8] sm:$0xff] %v240
                %v242 = vld [vmem:[%s176 + $0x200] sm:$0xff]
                %243 = vst [vmem:[%s177 + $0x100] sm:$0xff] %v242
                %v244 = vld [vmem:[%s176 + $0x208] sm:$0xff]
                %245 = vst [vmem:[%s177 + $0x108] sm:$0xff] %v244
                %v246 = vld [vmem:[%s176 + $0x210] sm:$0xff]
                %247 = vst [vmem:[%s177 + $0x110] sm:$0xff] %v246
                %v248 = vld [vmem:[%s176 + $0x218] sm:$0xff]
                %249 = vst [vmem:[%s177 + $0x118] sm:$0xff] %v248
                %v250 = vld [vmem:[%s176 + $0x220] sm:$0xff]
                %251 = vst [vmem:[%s177 + $0x120] sm:$0xff] %v250
                %v252 = vld [vmem:[%s176 + $0x228] sm:$0xff]
                %253 = vst [vmem:[%s177 + $0x128] sm:$0xff] %v252
                %v254 = vld [vmem:[%s176 + $0x230] sm:$0xff]
                %255 = vst [vmem:[%s177 + $0x130] sm:$0xff] %v254
                %v256 = vld [vmem:[%s176 + $0x238] sm:$0xff]
                %257 = vst [vmem:[%s177 + $0x138] sm:$0xff] %v256
                %v258 = vld [vmem:[%s176 + $0x280] sm:$0xff]
                %259 = vst [vmem:[%s177 + $0x140] sm:$0xff] %v258
                %v260 = vld [vmem:[%s176 + $0x288] sm:$0xff]
                %261 = vst [vmem:[%s177 + $0x148] sm:$0xff] %v260
                %v262 = vld [vmem:[%s176 + $0x290] sm:$0xff]
                %263 = vst [vmem:[%s177 + $0x150] sm:$0xff] %v262
                %v264 = vld [vmem:[%s176 + $0x298] sm:$0xff]
                %265 = vst [vmem:[%s177 + $0x158] sm:$0xff] %v264
                %v266 = vld [vmem:[%s176 + $0x2a0] sm:$0xff]
                %267 = vst [vmem:[%s177 + $0x160] sm:$0xff] %v266
                %v268 = vld [vmem:[%s176 + $0x2a8] sm:$0xff]
                %269 = vst [vmem:[%s177 + $0x168] sm:$0xff] %v268
                %v270 = vld [vmem:[%s176 + $0x2b0] sm:$0xff]
                %271 = vst [vmem:[%s177 + $0x170] sm:$0xff] %v270
                %v272 = vld [vmem:[%s176 + $0x2b8] sm:$0xff]
                %273 = vst [vmem:[%s177 + $0x178] sm:$0xff] %v272
                %v274 = vld [vmem:[%s176 + $0x300] sm:$0xff]
                %275 = vst [vmem:[%s177 + $0x180] sm:$0xff] %v274
                %v276 = vld [vmem:[%s176 + $0x308] sm:$0xff]
                %277 = vst [vmem:[%s177 + $0x188] sm:$0xff] %v276
                %v278 = vld [vmem:[%s176 + $0x310] sm:$0xff]
                %279 = vst [vmem:[%s177 + $0x190] sm:$0xff] %v278
                %v280 = vld [vmem:[%s176 + $0x318] sm:$0xff]
                %281 = vst [vmem:[%s177 + $0x198] sm:$0xff] %v280
                %v282 = vld [vmem:[%s176 + $0x320] sm:$0xff]
                %283 = vst [vmem:[%s177 + $0x1a0] sm:$0xff] %v282
                %v284 = vld [vmem:[%s176 + $0x328] sm:$0xff]
                %285 = vst [vmem:[%s177 + $0x1a8] sm:$0xff] %v284
                %v286 = vld [vmem:[%s176 + $0x330] sm:$0xff]
                %287 = vst [vmem:[%s177 + $0x1b0] sm:$0xff] %v286
                %v288 = vld [vmem:[%s176 + $0x338] sm:$0xff]
                %289 = vst [vmem:[%s177 + $0x1b8] sm:$0xff] %v288
                %v290 = vld [vmem:[%s176 + $0x380] sm:$0xff]
                %291 = vst [vmem:[%s177 + $0x1c0] sm:$0xff] %v290
                %v292 = vld [vmem:[%s176 + $0x388] sm:$0xff]
                %293 = vst [vmem:[%s177 + $0x1c8] sm:$0xff] %v292
                %v294 = vld [vmem:[%s176 + $0x390] sm:$0xff]
                %295 = vst [vmem:[%s177 + $0x1d0] sm:$0xff] %v294
                %v296 = vld [vmem:[%s176 + $0x398] sm:$0xff]
                %297 = vst [vmem:[%s177 + $0x1d8] sm:$0xff] %v296
                %v298 = vld [vmem:[%s176 + $0x3a0] sm:$0xff]
                %299 = vst [vmem:[%s177 + $0x1e0] sm:$0xff] %v298
                %v300 = vld [vmem:[%s176 + $0x3a8] sm:$0xff]
                %301 = vst [vmem:[%s177 + $0x1e8] sm:$0xff] %v300
                %v302 = vld [vmem:[%s176 + $0x3b0] sm:$0xff]
                %303 = vst [vmem:[%s177 + $0x1f0] sm:$0xff] %v302
                %v304 = vld [vmem:[%s176 + $0x3b8] sm:$0xff]
                %305 = vst [vmem:[%s177 + $0x1f8] sm:$0xff] %v304
                %v306 = vld [vmem:[%s176 + $0x400] sm:$0xff]
                %307 = vst [vmem:[%s177 + $0x200] sm:$0xff] %v306
                %v308 = vld [vmem:[%s176 + $0x408] sm:$0xff]
                %309 = vst [vmem:[%s177 + $0x208] sm:$0xff] %v308
                %v310 = vld [vmem:[%s176 + $0x410] sm:$0xff]
                %311 = vst [vmem:[%s177 + $0x210] sm:$0xff] %v310
                %v312 = vld [vmem:[%s176 + $0x418] sm:$0xff]
                %313 = vst [vmem:[%s177 + $0x218] sm:$0xff] %v312
                %v314 = vld [vmem:[%s176 + $0x420] sm:$0xff]
                %315 = vst [vmem:[%s177 + $0x220] sm:$0xff] %v314
                %v316 = vld [vmem:[%s176 + $0x428] sm:$0xff]
                %317 = vst [vmem:[%s177 + $0x228] sm:$0xff] %v316
                %v318 = vld [vmem:[%s176 + $0x430] sm:$0xff]
                %319 = vst [vmem:[%s177 + $0x230] sm:$0xff] %v318
                %v320 = vld [vmem:[%s176 + $0x438] sm:$0xff]
                %321 = vst [vmem:[%s177 + $0x238] sm:$0xff] %v320
                %v322 = vld [vmem:[%s176 + $0x480] sm:$0xff]
                %323 = vst [vmem:[%s177 + $0x240] sm:$0xff] %v322
                %v324 = vld [vmem:[%s176 + $0x488] sm:$0xff]
                %325 = vst [vmem:[%s177 + $0x248] sm:$0xff] %v324
                %v326 = vld [vmem:[%s176 + $0x490] sm:$0xff]
                %327 = vst [vmem:[%s177 + $0x250] sm:$0xff] %v326
                %v328 = vld [vmem:[%s176 + $0x498] sm:$0xff]
                %329 = vst [vmem:[%s177 + $0x258] sm:$0xff] %v328
                %v330 = vld [vmem:[%s176 + $0x4a0] sm:$0xff]
                %331 = vst [vmem:[%s177 + $0x260] sm:$0xff] %v330
                %v332 = vld [vmem:[%s176 + $0x4a8] sm:$0xff]
                %333 = vst [vmem:[%s177 + $0x268] sm:$0xff] %v332
                %v334 = vld [vmem:[%s176 + $0x4b0] sm:$0xff]
                %335 = vst [vmem:[%s177 + $0x270] sm:$0xff] %v334
                %v336 = vld [vmem:[%s176 + $0x4b8] sm:$0xff]
                %337 = vst [vmem:[%s177 + $0x278] sm:$0xff] %v336
                %v338 = vld [vmem:[%s176 + $0x500] sm:$0xff]
                %339 = vst [vmem:[%s177 + $0x280] sm:$0xff] %v338
                %v340 = vld [vmem:[%s176 + $0x508] sm:$0xff]
                %341 = vst [vmem:[%s177 + $0x288] sm:$0xff] %v340
                %v342 = vld [vmem:[%s176 + $0x510] sm:$0xff]
                %343 = vst [vmem:[%s177 + $0x290] sm:$0xff] %v342
                %v344 = vld [vmem:[%s176 + $0x518] sm:$0xff]
                %345 = vst [vmem:[%s177 + $0x298] sm:$0xff] %v344
                %v346 = vld [vmem:[%s176 + $0x520] sm:$0xff]
                %347 = vst [vmem:[%s177 + $0x2a0] sm:$0xff] %v346
                %v348 = vld [vmem:[%s176 + $0x528] sm:$0xff]
                %349 = vst [vmem:[%s177 + $0x2a8] sm:$0xff] %v348
                %v350 = vld [vmem:[%s176 + $0x530] sm:$0xff]
                %351 = vst [vmem:[%s177 + $0x2b0] sm:$0xff] %v350
                %v352 = vld [vmem:[%s176 + $0x538] sm:$0xff]
                %353 = vst [vmem:[%s177 + $0x2b8] sm:$0xff] %v352
                %v354 = vld [vmem:[%s176 + $0x580] sm:$0xff]
                %355 = vst [vmem:[%s177 + $0x2c0] sm:$0xff] %v354
                %v356 = vld [vmem:[%s176 + $0x588] sm:$0xff]
                %357 = vst [vmem:[%s177 + $0x2c8] sm:$0xff] %v356
                %v358 = vld [vmem:[%s176 + $0x590] sm:$0xff]
                %359 = vst [vmem:[%s177 + $0x2d0] sm:$0xff] %v358
                %v360 = vld [vmem:[%s176 + $0x598] sm:$0xff]
                %361 = vst [vmem:[%s177 + $0x2d8] sm:$0xff] %v360
                %v362 = vld [vmem:[%s176 + $0x5a0] sm:$0xff]
                %363 = vst [vmem:[%s177 + $0x2e0] sm:$0xff] %v362
                %v364 = vld [vmem:[%s176 + $0x5a8] sm:$0xff]
                %365 = vst [vmem:[%s177 + $0x2e8] sm:$0xff] %v364
                %v366 = vld [vmem:[%s176 + $0x5b0] sm:$0xff]
                %367 = vst [vmem:[%s177 + $0x2f0] sm:$0xff] %v366
                %v368 = vld [vmem:[%s176 + $0x5b8] sm:$0xff]
                %369 = vst [vmem:[%s177 + $0x2f8] sm:$0xff] %v368
                %v370 = vld [vmem:[%s176 + $0x600] sm:$0xff]
                %371 = vst [vmem:[%s177 + $0x300] sm:$0xff] %v370
                %v372 = vld [vmem:[%s176 + $0x608] sm:$0xff]
                %373 = vst [vmem:[%s177 + $0x308] sm:$0xff] %v372
                %v374 = vld [vmem:[%s176 + $0x610] sm:$0xff]
                %375 = vst [vmem:[%s177 + $0x310] sm:$0xff] %v374
                %v376 = vld [vmem:[%s176 + $0x618] sm:$0xff]
                %377 = vst [vmem:[%s177 + $0x318] sm:$0xff] %v376
                %v378 = vld [vmem:[%s176 + $0x620] sm:$0xff]
                %379 = vst [vmem:[%s177 + $0x320] sm:$0xff] %v378
                %v380 = vld [vmem:[%s176 + $0x628] sm:$0xff]
                %381 = vst [vmem:[%s177 + $0x328] sm:$0xff] %v380
                %v382 = vld [vmem:[%s176 + $0x630] sm:$0xff]
                %383 = vst [vmem:[%s177 + $0x330] sm:$0xff] %v382
                %v384 = vld [vmem:[%s176 + $0x638] sm:$0xff]
                %385 = vst [vmem:[%s177 + $0x338] sm:$0xff] %v384
                %v386 = vld [vmem:[%s176 + $0x680] sm:$0xff]
                %387 = vst [vmem:[%s177 + $0x340] sm:$0xff] %v386
                %v388 = vld [vmem:[%s176 + $0x688] sm:$0xff]
                %389 = vst [vmem:[%s177 + $0x348] sm:$0xff] %v388
                %v390 = vld [vmem:[%s176 + $0x690] sm:$0xff]
                %391 = vst [vmem:[%s177 + $0x350] sm:$0xff] %v390
                %v392 = vld [vmem:[%s176 + $0x698] sm:$0xff]
                %393 = vst [vmem:[%s177 + $0x358] sm:$0xff] %v392
                %v394 = vld [vmem:[%s176 + $0x6a0] sm:$0xff]
                %395 = vst [vmem:[%s177 + $0x360] sm:$0xff] %v394
                %v396 = vld [vmem:[%s176 + $0x6a8] sm:$0xff]
                %397 = vst [vmem:[%s177 + $0x368] sm:$0xff] %v396
                %v398 = vld [vmem:[%s176 + $0x6b0] sm:$0xff]
                %399 = vst [vmem:[%s177 + $0x370] sm:$0xff] %v398
                %v400 = vld [vmem:[%s176 + $0x6b8] sm:$0xff]
                %401 = vst [vmem:[%s177 + $0x378] sm:$0xff] %v400
                %v402 = vld [vmem:[%s176 + $0x700] sm:$0xff]
                %403 = vst [vmem:[%s177 + $0x380] sm:$0xff] %v402
                %v404 = vld [vmem:[%s176 + $0x708] sm:$0xff]
                %405 = vst [vmem:[%s177 + $0x388] sm:$0xff] %v404
                %v406 = vld [vmem:[%s176 + $0x710] sm:$0xff]
                %407 = vst [vmem:[%s177 + $0x390] sm:$0xff] %v406
                %v408 = vld [vmem:[%s176 + $0x718] sm:$0xff]
                %409 = vst [vmem:[%s177 + $0x398] sm:$0xff] %v408
                %v410 = vld [vmem:[%s176 + $0x720] sm:$0xff]
                %411 = vst [vmem:[%s177 + $0x3a0] sm:$0xff] %v410
                %v412 = vld [vmem:[%s176 + $0x728] sm:$0xff]
                %413 = vst [vmem:[%s177 + $0x3a8] sm:$0xff] %v412
                %v414 = vld [vmem:[%s176 + $0x730] sm:$0xff]
                %415 = vst [vmem:[%s177 + $0x3b0] sm:$0xff] %v414
                %v416 = vld [vmem:[%s176 + $0x738] sm:$0xff]
                %417 = vst [vmem:[%s177 + $0x3b8] sm:$0xff] %v416
                %v418 = vld [vmem:[%s176 + $0x780] sm:$0xff]
                %419 = vst [vmem:[%s177 + $0x3c0] sm:$0xff] %v418
                %v420 = vld [vmem:[%s176 + $0x788] sm:$0xff]
                %421 = vst [vmem:[%s177 + $0x3c8] sm:$0xff] %v420
                %v422 = vld [vmem:[%s176 + $0x790] sm:$0xff]
                %423 = vst [vmem:[%s177 + $0x3d0] sm:$0xff] %v422
                %v424 = vld [vmem:[%s176 + $0x798] sm:$0xff]
                %425 = vst [vmem:[%s177 + $0x3d8] sm:$0xff] %v424
                %v426 = vld [vmem:[%s176 + $0x7a0] sm:$0xff]
                %427 = vst [vmem:[%s177 + $0x3e0] sm:$0xff] %v426
                %v428 = vld [vmem:[%s176 + $0x7a8] sm:$0xff]
                %429 = vst [vmem:[%s177 + $0x3e8] sm:$0xff] %v428
                %v430 = vld [vmem:[%s176 + $0x7b0] sm:$0xff]
                %431 = vst [vmem:[%s177 + $0x3f0] sm:$0xff] %v430
                %v432 = vld [vmem:[%s176 + $0x7b8] sm:$0xff]
                %433 = vst [vmem:[%s177 + $0x3f8] sm:$0xff] %v432
              $region41: #{sparse_scaled_bn_conv2d.2} parent=35 // loop_footer
                %s175 = sadd.s32 1, %s171
              $region42: #{sparse_scaled_bn_conv2d.2} parent=35 // loop_footer_branch
                %170 = sbr.rel target = $region38
              $region43: #{sparse_scaled_bn_conv2d.2} parent=35 // loop_exit
                _
            $region36: #{sparse_scaled_bn_conv2d.2} parent=31 // pred_fallthru
              _
            // Predicated region
            $region44: #{sparse_scaled_bn_conv2d.2} parent=31 // pred_check
              _
            $region45: #{sparse_scaled_bn_conv2d.2} parent=31 // pred_check_branch
              %435 = sbr.rel target = $region47
            $region46: #{sparse_scaled_bn_conv2d.2} parent=31 // pred_region
              _
            $region47: #{sparse_scaled_bn_conv2d.2} parent=31 // pred_fallthru
              _
          $region32: #{sparse_scaled_bn_conv2d.2} parent=27 // pred_fallthru
            _
          %436 = vnop
        $region28: #{sparse_scaled_bn_conv2d.2} parent=23 // pred_fallthru
          _
      $region24: #{sparse_scaled_bn_conv2d.2} parent=5 // pred_fallthru
        _
      %p437 = scmp.le.s32.totalorder 1, %s11
      %p438 = scmp.lt.s32.totalorder %s11, 3
      %p439 = pnand %p437, %p438
      %p440 = pneg %p439
      // Predicated region
      $region48: #{sparse_scaled_bn_conv2d.2} parent=5 // pred_check
        _
      $region49: #{sparse_scaled_bn_conv2d.2} parent=5 // pred_check_branch
        %442 = sbr.rel (%p439) target = $region51
      $region50: #{sparse_scaled_bn_conv2d.2} parent=5 // pred_region
        %s443 = ssub.s32 %s11, 1
        %s444 = sand.u32 %s24, 1
        %s445 = sand.u32 %s24, 1
        %s446 = smul.addr %s445, 1024
        %s447 = scalar_lea.vmem [#allocation2], %s446
        // Predicated region
        $region52: #{sparse_scaled_bn_conv2d.2} parent=50 // pred_check
          %p448 = pneg %p37
        $region53: #{sparse_scaled_bn_conv2d.2} parent=50 // pred_check_branch
          %450 = sbr.rel (%p448) target = $region55
        $region54: #{sparse_scaled_bn_conv2d.2} parent=50 // pred_region
          _
        $region55: #{sparse_scaled_bn_conv2d.2} parent=50 // pred_fallthru
          _
        %s451 = sand.u32 %s24, 1
        %s452 = sand.u32 %s24, 1
        %s453 = smul.addr %s452, 1024
        %s454 = scalar_lea.vmem [#allocation2], %s453
        %p455 = pneg %p37
        %p456 = pneg %p34
        %p457 = pneg %p58
        %p458 = pneg %p55
        %p459 = pneg %p79
        %p460 = pneg %p76
        %p461 = pneg %p105
        %p462 = pneg %p102
        %s463 = smul.u32 4, %s16
        %p464 = scmp.lt.s32.totalorder %s463, 7
        %s465 = scalar_select %p464, %s463, 7
        %s466 = smul.addr %s465, 2
        %s467 = smul.addr %s466, 8
        %s468 = scalar_lea.vmem %s3, %s467
        %p469 = pneg %p131
        %p470 = pneg %p128
        %p471 = scmp.lt.s32.totalorder %s16, 1
        %s472 = scalar_select %p471, %s16, 1
        %s473 = smul.addr %s472, 16
        %s474 = smul.addr %s473, 8
        %s475 = scalar_lea.vmem %s4, %s474
        %s476 = smul.u32 8, %s16
        %s477 = smul.u32 4, %s16
        %p478 = scmp.lt.s32.totalorder %s477, 7
        %s479 = scalar_select %p478, %s477, 7
        %s480 = smul.addr %s479, 2
        %s481 = smul.addr %s480, 8
        %s482 = scalar_lea.vmem %s3, %s481
        %s483 = smul.u32 4, %s16
        %p484 = scmp.lt.s32.totalorder %s16, 1
        %s485 = scalar_select %p484, %s16, 1
        %s486 = smul.addr %s485, 16
        %s487 = smul.addr %s486, 8
        %s488 = scalar_lea.vmem %s4, %s487
        %v489 = vld [vmem:[%s1] sm:$0xff]
        %v490 = vld [vmem:[%s1 + $0x8] sm:$0xff]
        %v491 = vld [vmem:[%s1 + $0x10] sm:$0xff]
        %v492 = vld [vmem:[%s1 + $0x18] sm:$0xff]
        %v493 = vld [vmem:[%s1 + $0x20] sm:$0xff]
        %v494 = vld [vmem:[%s1 + $0x28] sm:$0xff]
        %v495 = vld [vmem:[%s1 + $0x30] sm:$0xff]
        %v496 = vld [vmem:[%s1 + $0x38] sm:$0xff]
        %v497 = vld [vmem:[%s1 + $0x40] sm:$0xff]
        %v498 = vld [vmem:[%s1 + $0x48] sm:$0xff]
        %v499 = vld [vmem:[%s1 + $0x50] sm:$0xff]
        %v500 = vld [vmem:[%s1 + $0x58] sm:$0xff]
        %v501 = vld [vmem:[%s1 + $0x60] sm:$0xff]
        %v502 = vld [vmem:[%s1 + $0x68] sm:$0xff]
        %v503 = vld [vmem:[%s1 + $0x70] sm:$0xff]
        %v504 = vld [vmem:[%s1 + $0x78] sm:$0xff]
        %v505 = vld [vmem:[%s447] sm:$0xff]
        %v506 = vld [vmem:[%s447 + $0x8] sm:$0xff]
        %v507 = vld [vmem:[%s447 + $0x10] sm:$0xff]
        %v508 = vld [vmem:[%s447 + $0x18] sm:$0xff]
        %v509 = vld [vmem:[%s447 + $0x20] sm:$0xff]
        %v510 = vld [vmem:[%s447 + $0x28] sm:$0xff]
        %v511 = vld [vmem:[%s447 + $0x30] sm:$0xff]
        %v512 = vld [vmem:[%s447 + $0x38] sm:$0xff]
        %v513 = vld [vmem:[%s447 + $0x40] sm:$0xff]
        %v514 = vld [vmem:[%s447 + $0x48] sm:$0xff]
        %v515 = vld [vmem:[%s447 + $0x50] sm:$0xff]
        %v516 = vld [vmem:[%s447 + $0x58] sm:$0xff]
        %v517 = vld [vmem:[%s447 + $0x60] sm:$0xff]
        %v518 = vld [vmem:[%s447 + $0x68] sm:$0xff]
        %v519 = vld [vmem:[%s447 + $0x70] sm:$0xff]
        %v520 = vld [vmem:[%s447 + $0x78] sm:$0xff]
        %v521 = vld [vmem:[%s447 + $0x80] sm:$0xff]
        %v522 = vld [vmem:[%s447 + $0x88] sm:$0xff]
        %v523 = vld [vmem:[%s447 + $0x90] sm:$0xff]
        %v524 = vld [vmem:[%s447 + $0x98] sm:$0xff]
        %v525 = vld [vmem:[%s447 + $0xa0] sm:$0xff]
        %v526 = vld [vmem:[%s447 + $0xa8] sm:$0xff]
        %v527 = vld [vmem:[%s447 + $0xb0] sm:$0xff]
        %v528 = vld [vmem:[%s447 + $0xb8] sm:$0xff]
        %v529 = vld [vmem:[%s447 + $0xc0] sm:$0xff]
        %v530 = vld [vmem:[%s447 + $0xc8] sm:$0xff]
        %v531 = vld [vmem:[%s447 + $0xd0] sm:$0xff]
        %v532 = vld [vmem:[%s447 + $0xd8] sm:$0xff]
        %v533 = vld [vmem:[%s447 + $0xe0] sm:$0xff]
        %v534 = vld [vmem:[%s447 + $0xe8] sm:$0xff]
        %v535 = vld [vmem:[%s447 + $0xf0] sm:$0xff]
        %v536 = vld [vmem:[%s447 + $0xf8] sm:$0xff]
        %v537 = vld [vmem:[%s447 + $0x100] sm:$0xff]
        %v538 = vld [vmem:[%s447 + $0x108] sm:$0xff]
        %v539 = vld [vmem:[%s447 + $0x110] sm:$0xff]
        %v540 = vld [vmem:[%s447 + $0x118] sm:$0xff]
        %v541 = vld [vmem:[%s447 + $0x120] sm:$0xff]
        %v542 = vld [vmem:[%s447 + $0x128] sm:$0xff]
        %v543 = vld [vmem:[%s447 + $0x130] sm:$0xff]
        %v544 = vld [vmem:[%s447 + $0x138] sm:$0xff]
        %v545 = vld [vmem:[%s447 + $0x140] sm:$0xff]
        %v546 = vld [vmem:[%s447 + $0x148] sm:$0xff]
        %v547 = vld [vmem:[%s447 + $0x150] sm:$0xff]
        %v548 = vld [vmem:[%s447 + $0x158] sm:$0xff]
        %v549 = vld [vmem:[%s447 + $0x160] sm:$0xff]
        %v550 = vld [vmem:[%s447 + $0x168] sm:$0xff]
        %v551 = vld [vmem:[%s447 + $0x170] sm:$0xff]
        %v552 = vld [vmem:[%s447 + $0x178] sm:$0xff]
        %v553 = vld [vmem:[%s447 + $0x180] sm:$0xff]
        %v554 = vld [vmem:[%s447 + $0x188] sm:$0xff]
        %v555 = vld [vmem:[%s447 + $0x190] sm:$0xff]
        %v556 = vld [vmem:[%s447 + $0x198] sm:$0xff]
        %v557 = vld [vmem:[%s447 + $0x1a0] sm:$0xff]
        %v558 = vld [vmem:[%s447 + $0x1a8] sm:$0xff]
        %v559 = vld [vmem:[%s447 + $0x1b0] sm:$0xff]
        %v560 = vld [vmem:[%s447 + $0x1b8] sm:$0xff]
        %v561 = vld [vmem:[%s447 + $0x1c0] sm:$0xff]
        %v562 = vld [vmem:[%s447 + $0x1c8] sm:$0xff]
        %v563 = vld [vmem:[%s447 + $0x1d0] sm:$0xff]
        %v564 = vld [vmem:[%s447 + $0x1d8] sm:$0xff]
        %v565 = vld [vmem:[%s447 + $0x1e0] sm:$0xff]
        %v566 = vld [vmem:[%s447 + $0x1e8] sm:$0xff]
        %v567 = vld [vmem:[%s447 + $0x1f0] sm:$0xff]
        %v568 = vld [vmem:[%s447 + $0x1f8] sm:$0xff]
        %v569 = vld [vmem:[%s447 + $0x200] sm:$0xff]
        %v570 = vld [vmem:[%s447 + $0x208] sm:$0xff]
        %v571 = vld [vmem:[%s447 + $0x210] sm:$0xff]
        %v572 = vld [vmem:[%s447 + $0x218] sm:$0xff]
        %v573 = vld [vmem:[%s447 + $0x220] sm:$0xff]
        %v574 = vld [vmem:[%s447 + $0x228] sm:$0xff]
        %v575 = vld [vmem:[%s447 + $0x230] sm:$0xff]
        %v576 = vld [vmem:[%s447 + $0x238] sm:$0xff]
        %v577 = vld [vmem:[%s447 + $0x240] sm:$0xff]
        %v578 = vld [vmem:[%s447 + $0x248] sm:$0xff]
        %v579 = vld [vmem:[%s447 + $0x250] sm:$0xff]
        %v580 = vld [vmem:[%s447 + $0x258] sm:$0xff]
        %v581 = vld [vmem:[%s447 + $0x260] sm:$0xff]
        %v582 = vld [vmem:[%s447 + $0x268] sm:$0xff]
        %v583 = vld [vmem:[%s447 + $0x270] sm:$0xff]
        %v584 = vld [vmem:[%s447 + $0x278] sm:$0xff]
        %v585 = vld [vmem:[%s447 + $0x280] sm:$0xff]
        %v586 = vld [vmem:[%s447 + $0x288] sm:$0xff]
        %v587 = vld [vmem:[%s447 + $0x290] sm:$0xff]
        %v588 = vld [vmem:[%s447 + $0x298] sm:$0xff]
        %v589 = vld [vmem:[%s447 + $0x2a0] sm:$0xff]
        %v590 = vld [vmem:[%s447 + $0x2a8] sm:$0xff]
        %v591 = vld [vmem:[%s447 + $0x2b0] sm:$0xff]
        %v592 = vld [vmem:[%s447 + $0x2b8] sm:$0xff]
        %v593 = vld [vmem:[%s447 + $0x2c0] sm:$0xff]
        %v594 = vld [vmem:[%s447 + $0x2c8] sm:$0xff]
        %v595 = vld [vmem:[%s447 + $0x2d0] sm:$0xff]
        %v596 = vld [vmem:[%s447 + $0x2d8] sm:$0xff]
        %v597 = vld [vmem:[%s447 + $0x2e0] sm:$0xff]
        %v598 = vld [vmem:[%s447 + $0x2e8] sm:$0xff]
        %v599 = vld [vmem:[%s447 + $0x2f0] sm:$0xff]
        %v600 = vld [vmem:[%s447 + $0x2f8] sm:$0xff]
        %v601 = vld [vmem:[%s447 + $0x300] sm:$0xff]
        %v602 = vld [vmem:[%s447 + $0x308] sm:$0xff]
        %v603 = vld [vmem:[%s447 + $0x310] sm:$0xff]
        %v604 = vld [vmem:[%s447 + $0x318] sm:$0xff]
        %v605 = vld [vmem:[%s447 + $0x320] sm:$0xff]
        %v606 = vld [vmem:[%s447 + $0x328] sm:$0xff]
        %v607 = vld [vmem:[%s447 + $0x330] sm:$0xff]
        %v608 = vld [vmem:[%s447 + $0x338] sm:$0xff]
        %v609 = vld [vmem:[%s447 + $0x340] sm:$0xff]
        %v610 = vld [vmem:[%s447 + $0x348] sm:$0xff]
        %v611 = vld [vmem:[%s447 + $0x350] sm:$0xff]
        %v612 = vld [vmem:[%s447 + $0x358] sm:$0xff]
        %v613 = vld [vmem:[%s447 + $0x360] sm:$0xff]
        %v614 = vld [vmem:[%s447 + $0x368] sm:$0xff]
        %v615 = vld [vmem:[%s447 + $0x370] sm:$0xff]
        %v616 = vld [vmem:[%s447 + $0x378] sm:$0xff]
        %v617 = vld [vmem:[%s447 + $0x380] sm:$0xff]
        %v618 = vld [vmem:[%s447 + $0x388] sm:$0xff]
        %v619 = vld [vmem:[%s447 + $0x390] sm:$0xff]
        %v620 = vld [vmem:[%s447 + $0x398] sm:$0xff]
        %v621 = vld [vmem:[%s447 + $0x3a0] sm:$0xff]
        %v622 = vld [vmem:[%s447 + $0x3a8] sm:$0xff]
        %v623 = vld [vmem:[%s447 + $0x3b0] sm:$0xff]
        %v624 = vld [vmem:[%s447 + $0x3b8] sm:$0xff]
        %v625 = vld [vmem:[%s447 + $0x3c0] sm:$0xff]
        %v626 = vld [vmem:[%s447 + $0x3c8] sm:$0xff]
        %v627 = vld [vmem:[%s447 + $0x3d0] sm:$0xff]
        %v628 = vld [vmem:[%s447 + $0x3d8] sm:$0xff]
        %v629 = vld [vmem:[%s447 + $0x3e0] sm:$0xff]
        %v630 = vld [vmem:[%s447 + $0x3e8] sm:$0xff]
        %v631 = vld [vmem:[%s447 + $0x3f0] sm:$0xff]
        %v632 = vld [vmem:[%s447 + $0x3f8] sm:$0xff]
        %633 = vmatprep.subr.mxu0 %v506
        %634 = vmatpush1.msra.mxu0 %v505
        %635 = vmatprep.subr.mxu0 %v514
        %636 = vmatpush1.msra.mxu0 %v513
        %637 = vmatprep.subr.mxu0 %v522
        %638 = vmatpush1.msra.mxu0 %v521
        %639 = vmatprep.subr.mxu0 %v530
        %640 = vmatpush1.msra.mxu0 %v529
        %641 = vmatprep.subr.mxu0 %v538
        %642 = vmatpush1.msra.mxu0 %v537
        %643 = vmatprep.subr.mxu0 %v546
        %644 = vmatpush1.msra.mxu0 %v545
        %645 = vmatprep.subr.mxu0 %v554
        %646 = vmatpush1.msra.mxu0 %v553
        %647 = vmatprep.subr.mxu0 %v562
        %648 = vmatpush1.msra.mxu0 %v561
        %649 = vmatprep.subr.mxu0 %v570
        %650 = vmatpush1.msra.mxu0 %v569
        %651 = vmatprep.subr.mxu0 %v578
        %652 = vmatpush1.msra.mxu0 %v577
        %653 = vmatprep.subr.mxu0 %v586
        %654 = vmatpush1.msra.mxu0 %v585
        %655 = vmatprep.subr.mxu0 %v594
        %656 = vmatpush1.msra.mxu0 %v593
        %657 = vmatprep.subr.mxu0 %v602
        %658 = vmatpush1.msra.mxu0 %v601
        %659 = vmatprep.subr.mxu0 %v610
        %660 = vmatpush1.msra.mxu0 %v609
        %661 = vmatprep.subr.mxu0 %v618
        %662 = vmatpush1.msra.mxu0 %v617
        %663 = vmatprep.subr.mxu0 %v626
        %664 = vmatpush1.msra.mxu0 %v625
        %665 = vmatprep.subr.mxu0 0.0
        %666 = vmatpush1.msra.mxu0 0.0
        %667 = vmatprep.subr.mxu0 0.0
        %668 = vmatpush1.msra.mxu0 0.0
        %669 = vmatprep.subr.mxu0 0.0
        %670 = vmatpush1.msra.mxu0 0.0
        %671 = vmatprep.subr.mxu0 0.0
        %672 = vmatpush1.msra.mxu0 0.0
        %673 = vmatprep.subr.mxu0 0.0
        %674 = vmatpush1.msra.mxu0 0.0
        %675 = vmatprep.subr.mxu0 0.0
        %676 = vmatpush1.msra.mxu0 0.0
        %677 = vmatprep.subr.mxu0 0.0
        %678 = vmatpush1.msra.mxu0 0.0
        %679 = vmatprep.subr.mxu0 0.0
        %680 = vmatpush1.msra.mxu0 0.0
        %681 = vmatprep.subr.mxu0 0.0
        %682 = vmatpush1.msra.mxu0 0.0
        %683 = vmatprep.subr.mxu0 0.0
        %684 = vmatpush1.msra.mxu0 0.0
        %685 = vmatprep.subr.mxu0 0.0
        %686 = vmatpush1.msra.mxu0 0.0
        %687 = vmatprep.subr.mxu0 0.0
        %688 = vmatpush1.msra.mxu0 0.0
        %689 = vmatprep.subr.mxu0 0.0
        %690 = vmatpush1.msra.mxu0 0.0
        %691 = vmatprep.subr.mxu0 0.0
        %692 = vmatpush1.msra.mxu0 0.0
        %693 = vmatprep.subr.mxu0 0.0
        %694 = vmatpush1.msra.mxu0 0.0
        %695 = vmatprep.subr.mxu0 0.0
        %696 = vmatpush1.msra.mxu0 0.0
        %697 = vmatprep.mubr.f32.mxu0 0.0
        %698 = vmatmul.mubr.f32.gmra.mrb[0].mxu0 %v489
        %v699 = vpop.f32.mrb[0].mxu0
        %v700 = vadd.f32 0.0, %v699
        %v701 = vpop.f32.mrb[0].mxu0
        %v702 = vadd.f32 0.0, %v701
        %703 = vmatprep.mubr.f32.mxu0 0.0
        %704 = vmatmul.mubr.f32.gmra.mrb[0].mxu0 %v490
        %v705 = vpop.f32.mrb[0].mxu0
        %v706 = vadd.f32 0.0, %v705
        %v707 = vpop.f32.mrb[0].mxu0
        %v708 = vadd.f32 0.0, %v707
        %709 = vmatprep.mubr.f32.mxu0 0.0
        %710 = vmatmul.mubr.f32.gmra.mrb[0].mxu0 %v491
        %v711 = vpop.f32.mrb[0].mxu0
        %v712 = vadd.f32 0.0, %v711
        %v713 = vpop.f32.mrb[0].mxu0
        %v714 = vadd.f32 0.0, %v713
        %715 = vmatprep.mubr.f32.mxu0 0.0
        %716 = vmatmul.mubr.f32.gmra.mrb[0].mxu0 %v492
        %v717 = vpop.f32.mrb[0].mxu0
        %v718 = vadd.f32 0.0, %v717
        %v719 = vpop.f32.mrb[0].mxu0
        %v720 = vadd.f32 0.0, %v719
        %721 = vmatprep.mubr.f32.mxu0 0.0
        %722 = vmatmul.mubr.f32.gmra.mrb[0].mxu0 %v493
        %v723 = vpop.f32.mrb[0].mxu0
        %v724 = vadd.f32 0.0, %v723
        %v725 = vpop.f32.mrb[0].mxu0
        %v726 = vadd.f32 0.0, %v725
        %727 = vmatprep.mubr.f32.mxu0 0.0
        %728 = vmatmul.mubr.f32.gmra.mrb[0].mxu0 %v494
        %v729 = vpop.f32.mrb[0].mxu0
        %v730 = vadd.f32 0.0, %v729
        %v731 = vpop.f32.mrb[0].mxu0
        %v732 = vadd.f32 0.0, %v731
        %733 = vmatprep.mubr.f32.mxu0 0.0
        %734 = vmatmul.mubr.f32.gmra.mrb[0].mxu0 %v495
        %v735 = vpop.f32.mrb[0].mxu0
        %v736 = vadd.f32 0.0, %v735
        %v737 = vpop.f32.mrb[0].mxu0
        %v738 = vadd.f32 0.0, %v737
        %739 = vmatprep.mubr.f32.mxu0 0.0
        %740 = vmatmul.mubr.f32.gmra.mrb[0].mxu0 %v496
        %v741 = vpop.f32.mrb[0].mxu0
        %v742 = vadd.f32 0.0, %v741
        %v743 = vpop.f32.mrb[0].mxu0
        %v744 = vadd.f32 0.0, %v743
        %745 = vmatprep.mubr.f32.mxu0 0.0
        %746 = vmatmul.mubr.f32.gmra.mrb[0].mxu0 %v497
        %v747 = vpop.f32.mrb[0].mxu0
        %v748 = vadd.f32 0.0, %v747
        %v749 = vpop.f32.mrb[0].mxu0
        %v750 = vadd.f32 0.0, %v749
        %751 = vmatprep.mubr.f32.mxu0 0.0
        %752 = vmatmul.mubr.f32.gmra.mrb[0].mxu0 %v498
        %v753 = vpop.f32.mrb[0].mxu0
        %v754 = vadd.f32 0.0, %v753
        %v755 = vpop.f32.mrb[0].mxu0
        %v756 = vadd.f32 0.0, %v755
        %757 = vmatprep.mubr.f32.mxu0 0.0
        %758 = vmatmul.mubr.f32.gmra.mrb[0].mxu0 %v499
        %v759 = vpop.f32.mrb[0].mxu0
        %v760 = vadd.f32 0.0, %v759
        %v761 = vpop.f32.mrb[0].mxu0
        %v762 = vadd.f32 0.0, %v761
        %763 = vmatprep.mubr.f32.mxu0 0.0
        %764 = vmatmul.mubr.f32.gmra.mrb[0].mxu0 %v500
        %v765 = vpop.f32.mrb[0].mxu0
        %v766 = vadd.f32 0.0, %v765
        %v767 = vpop.f32.mrb[0].mxu0
        %v768 = vadd.f32 0.0, %v767
        %769 = vmatprep.mubr.f32.mxu0 0.0
        %770 = vmatmul.mubr.f32.gmra.mrb[0].mxu0 %v501
        %v771 = vpop.f32.mrb[0].mxu0
        %v772 = vadd.f32 0.0, %v771
        %v773 = vpop.f32.mrb[0].mxu0
        %v774 = vadd.f32 0.0, %v773
        %775 = vmatprep.mubr.f32.mxu0 0.0
        %776 = vmatmul.mubr.f32.gmra.mrb[0].mxu0 %v502
        %v777 = vpop.f32.mrb[0].mxu0
        %v778 = vadd.f32 0.0, %v777
        %v779 = vpop.f32.mrb[0].mxu0
        %v780 = vadd.f32 0.0, %v779
        %781 = vmatprep.mubr.f32.mxu0 0.0
        %782 = vmatmul.mubr.f32.gmra.mrb[0].mxu0 %v503
        %v783 = vpop.f32.mrb[0].mxu0
        %v784 = vadd.f32 0.0, %v783
        %v785 = vpop.f32.mrb[0].mxu0
        %v786 = vadd.f32 0.0, %v785
        %787 = vmatprep.mubr.f32.mxu0 0.0
        %788 = vmatmul.mubr.f32.gmra.mrb[0].mxu0 %v504
        %v789 = vpop.f32.mrb[0].mxu0
        %v790 = vadd.f32 0.0, %v789
        %v791 = vpop.f32.mrb[0].mxu0
        %v792 = vadd.f32 0.0, %v791
        %793 = vdwg.mxu0
        %794 = vmatprep.subr.mxu0 %v508
        %795 = vmatpush1.msra.mxu0 %v507
        %796 = vmatprep.subr.mxu0 %v516
        %797 = vmatpush1.msra.mxu0 %v515
        %798 = vmatprep.subr.mxu0 %v524
        %799 = vmatpush1.msra.mxu0 %v523
        %800 = vmatprep.subr.mxu0 %v532
        %801 = vmatpush1.msra.mxu0 %v531
        %802 = vmatprep.subr.mxu0 %v540
        %803 = vmatpush1.msra.mxu0 %v539
        %804 = vmatprep.subr.mxu0 %v548
        %805 = vmatpush1.msra.mxu0 %v547
        %806 = vmatprep.subr.mxu0 %v556
        %807 = vmatpush1.msra.mxu0 %v555
        %808 = vmatprep.subr.mxu0 %v564
        %809 = vmatpush1.msra.mxu0 %v563
        %810 = vmatprep.subr.mxu0 %v572
        %811 = vmatpush1.msra.mxu0 %v571
        %812 = vmatprep.subr.mxu0 %v580
        %813 = vmatpush1.msra.mxu0 %v579
        %814 = vmatprep.subr.mxu0 %v588
        %815 = vmatpush1.msra.mxu0 %v587
        %816 = vmatprep.subr.mxu0 %v596
        %817 = vmatpush1.msra.mxu0 %v595
        %818 = vmatprep.subr.mxu0 %v604
        %819 = vmatpush1.msra.mxu0 %v603
        %820 = vmatprep.subr.mxu0 %v612
        %821 = vmatpush1.msra.mxu0 %v611
        %822 = vmatprep.subr.mxu0 %v620
        %823 = vmatpush1.msra.mxu0 %v619
        %824 = vmatprep.subr.mxu0 %v628
        %825 = vmatpush1.msra.mxu0 %v627
        %826 = vmatprep.subr.mxu0 0.0
        %827 = vmatpush1.msra.mxu0 0.0
        %828 = vmatprep.subr.mxu0 0.0
        %829 = vmatpush1.msra.mxu0 0.0
        %830 = vmatprep.subr.mxu0 0.0
        %831 = vmatpush1.msra.mxu0 0.0
        %832 = vmatprep.subr.mxu0 0.0
        %833 = vmatpush1.msra.mxu0 0.0
        %834 = vmatprep.subr.mxu0 0.0
        %835 = vmatpush1.msra.mxu0 0.0
        %836 = vmatprep.subr.mxu0 0.0
        %837 = vmatpush1.msra.mxu0 0.0
        %838 = vmatprep.subr.mxu0 0.0
        %839 = vmatpush1.msra.mxu0 0.0
        %840 = vmatprep.subr.mxu0 0.0
        %841 = vmatpush1.msra.mxu0 0.0
        %842 = vmatprep.subr.mxu0 0.0
        %843 = vmatpush1.msra.mxu0 0.0
        %844 = vmatprep.subr.mxu0 0.0
        %845 = vmatpush1.msra.mxu0 0.0
        %846 = vmatprep.subr.mxu0 0.0
        %847 = vmatpush1.msra.mxu0 0.0
        %848 = vmatprep.subr.mxu0 0.0
        %849 = vmatpush1.msra.mxu0 0.0
        %850 = vmatprep.subr.mxu0 0.0
        %851 = vmatpush1.msra.mxu0 0.0
        %852 = vmatprep.subr.mxu0 0.0
        %853 = vmatpush1.msra.mxu0 0.0
        %854 = vmatprep.subr.mxu0 0.0
        %855 = vmatpush1.msra.mxu0 0.0
        %856 = vmatprep.subr.mxu0 0.0
        %857 = vmatpush1.msra.mxu0 0.0
        %858 = vmatprep.mubr.f32.mxu0 0.0
        %859 = vmatmul.mubr.f32.gmra.mrb[0].mxu0 %v489
        %v860 = vpop.f32.mrb[0].mxu0
        %v861 = vadd.f32 0.0, %v860
        %v862 = vpop.f32.mrb[0].mxu0
        %v863 = vadd.f32 0.0, %v862
        %864 = vmatprep.mubr.f32.mxu0 0.0
        %865 = vmatmul.mubr.f32.gmra.mrb[0].mxu0 %v490
        %v866 = vpop.f32.mrb[0].mxu0
        %v867 = vadd.f32 0.0, %v866
        %v868 = vpop.f32.mrb[0].mxu0
        %v869 = vadd.f32 0.0, %v868
        %870 = vmatprep.mubr.f32.mxu0 0.0
        %871 = vmatmul.mubr.f32.gmra.mrb[0].mxu0 %v491
        %v872 = vpop.f32.mrb[0].mxu0
        %v873 = vadd.f32 0.0, %v872
        %v874 = vpop.f32.mrb[0].mxu0
        %v875 = vadd.f32 0.0, %v874
        %876 = vmatprep.mubr.f32.mxu0 0.0
        %877 = vmatmul.mubr.f32.gmra.mrb[0].mxu0 %v492
        %v878 = vpop.f32.mrb[0].mxu0
        %v879 = vadd.f32 0.0, %v878
        %v880 = vpop.f32.mrb[0].mxu0
        %v881 = vadd.f32 0.0, %v880
        %882 = vmatprep.mubr.f32.mxu0 0.0
        %883 = vmatmul.mubr.f32.gmra.mrb[0].mxu0 %v493
        %v884 = vpop.f32.mrb[0].mxu0
        %v885 = vadd.f32 0.0, %v884
        %v886 = vpop.f32.mrb[0].mxu0
        %v887 = vadd.f32 0.0, %v886
        %888 = vmatprep.mubr.f32.mxu0 0.0
        %889 = vmatmul.mubr.f32.gmra.mrb[0].mxu0 %v494
        %v890 = vpop.f32.mrb[0].mxu0
        %v891 = vadd.f32 0.0, %v890
        %v892 = vpop.f32.mrb[0].mxu0
        %v893 = vadd.f32 0.0, %v892
        %894 = vmatprep.mubr.f32.mxu0 0.0
        %895 = vmatmul.mubr.f32.gmra.mrb[0].mxu0 %v495
        %v896 = vpop.f32.mrb[0].mxu0
        %v897 = vadd.f32 0.0, %v896
        %v898 = vpop.f32.mrb[0].mxu0
        %v899 = vadd.f32 0.0, %v898
        %900 = vmatprep.mubr.f32.mxu0 0.0
        %901 = vmatmul.mubr.f32.gmra.mrb[0].mxu0 %v496
        %v902 = vpop.f32.mrb[0].mxu0
        %v903 = vadd.f32 0.0, %v902
        %v904 = vpop.f32.mrb[0].mxu0
        %v905 = vadd.f32 0.0, %v904
        %906 = vmatprep.mubr.f32.mxu0 0.0
        %907 = vmatmul.mubr.f32.gmra.mrb[0].mxu0 %v497
        %v908 = vpop.f32.mrb[0].mxu0
        %v909 = vadd.f32 0.0, %v908
        %v910 = vpop.f32.mrb[0].mxu0
        %v911 = vadd.f32 0.0, %v910
        %912 = vmatprep.mubr.f32.mxu0 0.0
        %913 = vmatmul.mubr.f32.gmra.mrb[0].mxu0 %v498
        %v914 = vpop.f32.mrb[0].mxu0
        %v915 = vadd.f32 0.0, %v914
        %v916 = vpop.f32.mrb[0].mxu0
        %v917 = vadd.f32 0.0, %v916
        %918 = vmatprep.mubr.f32.mxu0 0.0
        %919 = vmatmul.mubr.f32.gmra.mrb[0].mxu0 %v499
        %v920 = vpop.f32.mrb[0].mxu0
        %v921 = vadd.f32 0.0, %v920
        %v922 = vpop.f32.mrb[0].mxu0
        %v923 = vadd.f32 0.0, %v922
        %924 = vmatprep.mubr.f32.mxu0 0.0
        %925 = vmatmul.mubr.f32.gmra.mrb[0].mxu0 %v500
        %v926 = vpop.f32.mrb[0].mxu0
        %v927 = vadd.f32 0.0, %v926
        %v928 = vpop.f32.mrb[0].mxu0
        %v929 = vadd.f32 0.0, %v928
        %930 = vmatprep.mubr.f32.mxu0 0.0
        %931 = vmatmul.mubr.f32.gmra.mrb[0].mxu0 %v501
        %v932 = vpop.f32.mrb[0].mxu0
        %v933 = vadd.f32 0.0, %v932
        %v934 = vpop.f32.mrb[0].mxu0
        %v935 = vadd.f32 0.0, %v934
        %936 = vmatprep.mubr.f32.mxu0 0.0
        %937 = vmatmul.mubr.f32.gmra.mrb[0].mxu0 %v502
        %v938 = vpop.f32.mrb[0].mxu0
        %v939 = vadd.f32 0.0, %v938
        %v940 = vpop.f32.mrb[0].mxu0
        %v941 = vadd.f32 0.0, %v940
        %942 = vmatprep.mubr.f32.mxu0 0.0
        %943 = vmatmul.mubr.f32.gmra.mrb[0].mxu0 %v503
        %v944 = vpop.f32.mrb[0].mxu0
        %v945 = vadd.f32 0.0, %v944
        %v946 = vpop.f32.mrb[0].mxu0
        %v947 = vadd.f32 0.0, %v946
        %948 = vmatprep.mubr.f32.mxu0 0.0
        %949 = vmatmul.mubr.f32.gmra.mrb[0].mxu0 %v504
        %v950 = vpop.f32.mrb[0].mxu0
        %v951 = vadd.f32 0.0, %v950
        %v952 = vpop.f32.mrb[0].mxu0
        %v953 = vadd.f32 0.0, %v952
        %954 = vdwg.mxu0
        %955 = vmatprep.subr.mxu0 %v510
        %956 = vmatpush1.msra.mxu0 %v509
        %957 = vmatprep.subr.mxu0 %v518
        %958 = vmatpush1.msra.mxu0 %v517
        %959 = vmatprep.subr.mxu0 %v526
        %960 = vmatpush1.msra.mxu0 %v525
        %961 = vmatprep.subr.mxu0 %v534
        %962 = vmatpush1.msra.mxu0 %v533
        %963 = vmatprep.subr.mxu0 %v542
        %964 = vmatpush1.msra.mxu0 %v541
        %965 = vmatprep.subr.mxu0 %v550
        %966 = vmatpush1.msra.mxu0 %v549
        %967 = vmatprep.subr.mxu0 %v558
        %968 = vmatpush1.msra.mxu0 %v557
        %969 = vmatprep.subr.mxu0 %v566
        %970 = vmatpush1.msra.mxu0 %v565
        %971 = vmatprep.subr.mxu0 %v574
        %972 = vmatpush1.msra.mxu0 %v573
        %973 = vmatprep.subr.mxu0 %v582
        %974 = vmatpush1.msra.mxu0 %v581
        %975 = vmatprep.subr.mxu0 %v590
        %976 = vmatpush1.msra.mxu0 %v589
        %977 = vmatprep.subr.mxu0 %v598
        %978 = vmatpush1.msra.mxu0 %v597
        %979 = vmatprep.subr.mxu0 %v606
        %980 = vmatpush1.msra.mxu0 %v605
        %981 = vmatprep.subr.mxu0 %v614
        %982 = vmatpush1.msra.mxu0 %v613
        %983 = vmatprep.subr.mxu0 %v622
        %984 = vmatpush1.msra.mxu0 %v621
        %985 = vmatprep.subr.mxu0 %v630
        %986 = vmatpush1.msra.mxu0 %v629
        %987 = vmatprep.subr.mxu0 0.0
        %988 = vmatpush1.msra.mxu0 0.0
        %989 = vmatprep.subr.mxu0 0.0
        %990 = vmatpush1.msra.mxu0 0.0
        %991 = vmatprep.subr.mxu0 0.0
        %992 = vmatpush1.msra.mxu0 0.0
        %993 = vmatprep.subr.mxu0 0.0
        %994 = vmatpush1.msra.mxu0 0.0
        %995 = vmatprep.subr.mxu0 0.0
        %996 = vmatpush1.msra.mxu0 0.0
        %997 = vmatprep.subr.mxu0 0.0
        %998 = vmatpush1.msra.mxu0 0.0
        %999 = vmatprep.subr.mxu0 0.0
        %1000 = vmatpush1.msra.mxu0 0.0
        %1001 = vmatprep.subr.mxu0 0.0
        %1002 = vmatpush1.msra.mxu0 0.0
        %1003 = vmatprep.subr.mxu0 0.0
        %1004 = vmatpush1.msra.mxu0 0.0
        %1005 = vmatprep.subr.mxu0 0.0
        %1006 = vmatpush1.msra.mxu0 0.0
        %1007 = vmatprep.subr.mxu0 0.0
        %1008 = vmatpush1.msra.mxu0 0.0
        %1009 = vmatprep.subr.mxu0 0.0
        %1010 = vmatpush1.msra.mxu0 0.0
        %1011 = vmatprep.subr.mxu0 0.0
        %1012 = vmatpush1.msra.mxu0 0.0
        %1013 = vmatprep.subr.mxu0 0.0
        %1014 = vmatpush1.msra.mxu0 0.0
        %1015 = vmatprep.subr.mxu0 0.0
        %1016 = vmatpush1.msra.mxu0 0.0
        %1017 = vmatprep.subr.mxu0 0.0
        %1018 = vmatpush1.msra.mxu0 0.0
        %1019 = vmatprep.mubr.f32.mxu0 0.0
        %1020 = vmatmul.mubr.f32.gmra.mrb[0].mxu0 %v489
        %v1021 = vpop.f32.mrb[0].mxu0
        %v1022 = vadd.f32 0.0, %v1021
        %v1023 = vpop.f32.mrb[0].mxu0
        %v1024 = vadd.f32 0.0, %v1023
        %1025 = vmatprep.mubr.f32.mxu0 0.0
        %1026 = vmatmul.mubr.f32.gmra.mrb[0].mxu0 %v490
        %v1027 = vpop.f32.mrb[0].mxu0
        %v1028 = vadd.f32 0.0, %v1027
        %v1029 = vpop.f32.mrb[0].mxu0
        %v1030 = vadd.f32 0.0, %v1029
        %1031 = vmatprep.mubr.f32.mxu0 0.0
        %1032 = vmatmul.mubr.f32.gmra.mrb[0].mxu0 %v491
        %v1033 = vpop.f32.mrb[0].mxu0
        %v1034 = vadd.f32 0.0, %v1033
        %v1035 = vpop.f32.mrb[0].mxu0
        %v1036 = vadd.f32 0.0, %v1035
        %1037 = vmatprep.mubr.f32.mxu0 0.0
        %1038 = vmatmul.mubr.f32.gmra.mrb[0].mxu0 %v492
        %v1039 = vpop.f32.mrb[0].mxu0
        %v1040 = vadd.f32 0.0, %v1039
        %v1041 = vpop.f32.mrb[0].mxu0
        %v1042 = vadd.f32 0.0, %v1041
        %1043 = vmatprep.mubr.f32.mxu0 0.0
        %1044 = vmatmul.mubr.f32.gmra.mrb[0].mxu0 %v493
        %v1045 = vpop.f32.mrb[0].mxu0
        %v1046 = vadd.f32 0.0, %v1045
        %v1047 = vpop.f32.mrb[0].mxu0
        %v1048 = vadd.f32 0.0, %v1047
        %1049 = vmatprep.mubr.f32.mxu0 0.0
        %1050 = vmatmul.mubr.f32.gmra.mrb[0].mxu0 %v494
        %v1051 = vpop.f32.mrb[0].mxu0
        %v1052 = vadd.f32 0.0, %v1051
        %v1053 = vpop.f32.mrb[0].mxu0
        %v1054 = vadd.f32 0.0, %v1053
        %1055 = vmatprep.mubr.f32.mxu0 0.0
        %1056 = vmatmul.mubr.f32.gmra.mrb[0].mxu0 %v495
        %v1057 = vpop.f32.mrb[0].mxu0
        %v1058 = vadd.f32 0.0, %v1057
        %v1059 = vpop.f32.mrb[0].mxu0
        %v1060 = vadd.f32 0.0, %v1059
        %1061 = vmatprep.mubr.f32.mxu0 0.0
        %1062 = vmatmul.mubr.f32.gmra.mrb[0].mxu0 %v496
        %v1063 = vpop.f32.mrb[0].mxu0
        %v1064 = vadd.f32 0.0, %v1063
        %v1065 = vpop.f32.mrb[0].mxu0
        %v1066 = vadd.f32 0.0, %v1065
        %1067 = vmatprep.mubr.f32.mxu0 0.0
        %1068 = vmatmul.mubr.f32.gmra.mrb[0].mxu0 %v497
        %v1069 = vpop.f32.mrb[0].mxu0
        %v1070 = vadd.f32 0.0, %v1069
        %v1071 = vpop.f32.mrb[0].mxu0
        %v1072 = vadd.f32 0.0, %v1071
        %1073 = vmatprep.mubr.f32.mxu0 0.0
        %1074 = vmatmul.mubr.f32.gmra.mrb[0].mxu0 %v498
        %v1075 = vpop.f32.mrb[0].mxu0
        %v1076 = vadd.f32 0.0, %v1075
        %v1077 = vpop.f32.mrb[0].mxu0
        %v1078 = vadd.f32 0.0, %v1077
        %1079 = vmatprep.mubr.f32.mxu0 0.0
        %1080 = vmatmul.mubr.f32.gmra.mrb[0].mxu0 %v499
        %v1081 = vpop.f32.mrb[0].mxu0
        %v1082 = vadd.f32 0.0, %v1081
        %v1083 = vpop.f32.mrb[0].mxu0
        %v1084 = vadd.f32 0.0, %v1083
        %1085 = vmatprep.mubr.f32.mxu0 0.0
        %1086 = vmatmul.mubr.f32.gmra.mrb[0].mxu0 %v500
        %v1087 = vpop.f32.mrb[0].mxu0
        %v1088 = vadd.f32 0.0, %v1087
        %v1089 = vpop.f32.mrb[0].mxu0
        %v1090 = vadd.f32 0.0, %v1089
        %1091 = vmatprep.mubr.f32.mxu0 0.0
        %1092 = vmatmul.mubr.f32.gmra.mrb[0].mxu0 %v501
        %v1093 = vpop.f32.mrb[0].mxu0
        %v1094 = vadd.f32 0.0, %v1093
        %v1095 = vpop.f32.mrb[0].mxu0
        %v1096 = vadd.f32 0.0, %v1095
        %1097 = vmatprep.mubr.f32.mxu0 0.0
        %1098 = vmatmul.mubr.f32.gmra.mrb[0].mxu0 %v502
        %v1099 = vpop.f32.mrb[0].mxu0
        %v1100 = vadd.f32 0.0, %v1099
        %v1101 = vpop.f32.mrb[0].mxu0
        %v1102 = vadd.f32 0.0, %v1101
        %1103 = vmatprep.mubr.f32.mxu0 0.0
        %1104 = vmatmul.mubr.f32.gmra.mrb[0].mxu0 %v503
        %v1105 = vpop.f32.mrb[0].mxu0
        %v1106 = vadd.f32 0.0, %v1105
        %v1107 = vpop.f32.mrb[0].mxu0
        %v1108 = vadd.f32 0.0, %v1107
        %1109 = vmatprep.mubr.f32.mxu0 0.0
        %1110 = vmatmul.mubr.f32.gmra.mrb[0].mxu0 %v504
        %v1111 = vpop.f32.mrb[0].mxu0
        %v1112 = vadd.f32 0.0, %v1111
        %v1113 = vpop.f32.mrb[0].mxu0
        %v1114 = vadd.f32 0.0, %v1113
        %1115 = vdwg.mxu0
        %1116 = vmatprep.subr.mxu0 %v512
        %1117 = vmatpush1.msra.mxu0 %v511
        %1118 = vmatprep.subr.mxu0 %v520
        %1119 = vmatpush1.msra.mxu0 %v519
        %1120 = vmatprep.subr.mxu0 %v528
        %1121 = vmatpush1.msra.mxu0 %v527
        %1122 = vmatprep.subr.mxu0 %v536
        %1123 = vmatpush1.msra.mxu0 %v535
        %1124 = vmatprep.subr.mxu0 %v544
        %1125 = vmatpush1.msra.mxu0 %v543
        %1126 = vmatprep.subr.mxu0 %v552
        %1127 = vmatpush1.msra.mxu0 %v551
        %1128 = vmatprep.subr.mxu0 %v560
        %1129 = vmatpush1.msra.mxu0 %v559
        %1130 = vmatprep.subr.mxu0 %v568
        %1131 = vmatpush1.msra.mxu0 %v567
        %1132 = vmatprep.subr.mxu0 %v576
        %1133 = vmatpush1.msra.mxu0 %v575
        %1134 = vmatprep.subr.mxu0 %v584
        %1135 = vmatpush1.msra.mxu0 %v583
        %1136 = vmatprep.subr.mxu0 %v592
        %1137 = vmatpush1.msra.mxu0 %v591
        %1138 = vmatprep.subr.mxu0 %v600
        %1139 = vmatpush1.msra.mxu0 %v599
        %1140 = vmatprep.subr.mxu0 %v608
        %1141 = vmatpush1.msra.mxu0 %v607
        %1142 = vmatprep.subr.mxu0 %v616
        %1143 = vmatpush1.msra.mxu0 %v615
        %1144 = vmatprep.subr.mxu0 %v624
        %1145 = vmatpush1.msra.mxu0 %v623
        %1146 = vmatprep.subr.mxu0 %v632
        %1147 = vmatpush1.msra.mxu0 %v631
        %1148 = vmatprep.subr.mxu0 0.0
        %1149 = vmatpush1.msra.mxu0 0.0
        %1150 = vmatprep.subr.mxu0 0.0
        %1151 = vmatpush1.msra.mxu0 0.0
        %1152 = vmatprep.subr.mxu0 0.0
        %1153 = vmatpush1.msra.mxu0 0.0
        %1154 = vmatprep.subr.mxu0 0.0
        %1155 = vmatpush1.msra.mxu0 0.0
        %1156 = vmatprep.subr.mxu0 0.0
        %1157 = vmatpush1.msra.mxu0 0.0
        %1158 = vmatprep.subr.mxu0 0.0
        %1159 = vmatpush1.msra.mxu0 0.0
        %1160 = vmatprep.subr.mxu0 0.0
        %1161 = vmatpush1.msra.mxu0 0.0
        %1162 = vmatprep.subr.mxu0 0.0
        %1163 = vmatpush1.msra.mxu0 0.0
        %1164 = vmatprep.subr.mxu0 0.0
        %1165 = vmatpush1.msra.mxu0 0.0
        %1166 = vmatprep.subr.mxu0 0.0
        %1167 = vmatpush1.msra.mxu0 0.0
        %1168 = vmatprep.subr.mxu0 0.0
        %1169 = vmatpush1.msra.mxu0 0.0
        %1170 = vmatprep.subr.mxu0 0.0
        %1171 = vmatpush1.msra.mxu0 0.0
        %1172 = vmatprep.subr.mxu0 0.0
        %1173 = vmatpush1.msra.mxu0 0.0
        %1174 = vmatprep.subr.mxu0 0.0
        %1175 = vmatpush1.msra.mxu0 0.0
        %1176 = vmatprep.subr.mxu0 0.0
        %1177 = vmatpush1.msra.mxu0 0.0
        %1178 = vmatprep.subr.mxu0 0.0
        %1179 = vmatpush1.msra.mxu0 0.0
        %1180 = vmatprep.mubr.f32.mxu0 0.0
        %1181 = vmatmul.mubr.f32.gmra.mrb[0].mxu0 %v489
        %v1182 = vpop.f32.mrb[0].mxu0
        %v1183 = vadd.f32 0.0, %v1182
        %v1184 = vpop.f32.mrb[0].mxu0
        %v1185 = vadd.f32 0.0, %v1184
        %1186 = vmatprep.mubr.f32.mxu0 0.0
        %1187 = vmatmul.mubr.f32.gmra.mrb[0].mxu0 %v490
        %v1188 = vpop.f32.mrb[0].mxu0
        %v1189 = vadd.f32 0.0, %v1188
        %v1190 = vpop.f32.mrb[0].mxu0
        %v1191 = vadd.f32 0.0, %v1190
        %1192 = vmatprep.mubr.f32.mxu0 0.0
        %1193 = vmatmul.mubr.f32.gmra.mrb[0].mxu0 %v491
        %v1194 = vpop.f32.mrb[0].mxu0
        %v1195 = vadd.f32 0.0, %v1194
        %v1196 = vpop.f32.mrb[0].mxu0
        %v1197 = vadd.f32 0.0, %v1196
        %1198 = vmatprep.mubr.f32.mxu0 0.0
        %1199 = vmatmul.mubr.f32.gmra.mrb[0].mxu0 %v492
        %v1200 = vpop.f32.mrb[0].mxu0
        %v1201 = vadd.f32 0.0, %v1200
        %v1202 = vpop.f32.mrb[0].mxu0
        %v1203 = vadd.f32 0.0, %v1202
        %1204 = vmatprep.mubr.f32.mxu0 0.0
        %1205 = vmatmul.mubr.f32.gmra.mrb[0].mxu0 %v493
        %v1206 = vpop.f32.mrb[0].mxu0
        %v1207 = vadd.f32 0.0, %v1206
        %v1208 = vpop.f32.mrb[0].mxu0
        %v1209 = vadd.f32 0.0, %v1208
        %1210 = vmatprep.mubr.f32.mxu0 0.0
        %1211 = vmatmul.mubr.f32.gmra.mrb[0].mxu0 %v494
        %v1212 = vpop.f32.mrb[0].mxu0
        %v1213 = vadd.f32 0.0, %v1212
        %v1214 = vpop.f32.mrb[0].mxu0
        %v1215 = vadd.f32 0.0, %v1214
        %1216 = vmatprep.mubr.f32.mxu0 0.0
        %1217 = vmatmul.mubr.f32.gmra.mrb[0].mxu0 %v495
        %v1218 = vpop.f32.mrb[0].mxu0
        %v1219 = vadd.f32 0.0, %v1218
        %v1220 = vpop.f32.mrb[0].mxu0
        %v1221 = vadd.f32 0.0, %v1220
        %1222 = vmatprep.mubr.f32.mxu0 0.0
        %1223 = vmatmul.mubr.f32.gmra.mrb[0].mxu0 %v496
        %v1224 = vpop.f32.mrb[0].mxu0
        %v1225 = vadd.f32 0.0, %v1224
        %v1226 = vpop.f32.mrb[0].mxu0
        %v1227 = vadd.f32 0.0, %v1226
        %1228 = vmatprep.mubr.f32.mxu0 0.0
        %1229 = vmatmul.mubr.f32.gmra.mrb[0].mxu0 %v497
        %v1230 = vpop.f32.mrb[0].mxu0
        %v1231 = vadd.f32 0.0, %v1230
        %v1232 = vpop.f32.mrb[0].mxu0
        %v1233 = vadd.f32 0.0, %v1232
        %1234 = vmatprep.mubr.f32.mxu0 0.0
        %1235 = vmatmul.mubr.f32.gmra.mrb[0].mxu0 %v498
        %v1236 = vpop.f32.mrb[0].mxu0
        %v1237 = vadd.f32 0.0, %v1236
        %v1238 = vpop.f32.mrb[0].mxu0
        %v1239 = vadd.f32 0.0, %v1238
        %1240 = vmatprep.mubr.f32.mxu0 0.0
        %1241 = vmatmul.mubr.f32.gmra.mrb[0].mxu0 %v499
        %v1242 = vpop.f32.mrb[0].mxu0
        %v1243 = vadd.f32 0.0, %v1242
        %v1244 = vpop.f32.mrb[0].mxu0
        %v1245 = vadd.f32 0.0, %v1244
        %1246 = vmatprep.mubr.f32.mxu0 0.0
        %1247 = vmatmul.mubr.f32.gmra.mrb[0].mxu0 %v500
        %v1248 = vpop.f32.mrb[0].mxu0
        %v1249 = vadd.f32 0.0, %v1248
        %v1250 = vpop.f32.mrb[0].mxu0
        %v1251 = vadd.f32 0.0, %v1250
        %1252 = vmatprep.mubr.f32.mxu0 0.0
        %1253 = vmatmul.mubr.f32.gmra.mrb[0].mxu0 %v501
        %v1254 = vpop.f32.mrb[0].mxu0
        %v1255 = vadd.f32 0.0, %v1254
        %v1256 = vpop.f32.mrb[0].mxu0
        %v1257 = vadd.f32 0.0, %v1256
        %1258 = vmatprep.mubr.f32.mxu0 0.0
        %1259 = vmatmul.mubr.f32.gmra.mrb[0].mxu0 %v502
        %v1260 = vpop.f32.mrb[0].mxu0
        %v1261 = vadd.f32 0.0, %v1260
        %v1262 = vpop.f32.mrb[0].mxu0
        %v1263 = vadd.f32 0.0, %v1262
        %1264 = vmatprep.mubr.f32.mxu0 0.0
        %1265 = vmatmul.mubr.f32.gmra.mrb[0].mxu0 %v503
        %v1266 = vpop.f32.mrb[0].mxu0
        %v1267 = vadd.f32 0.0, %v1266
        %v1268 = vpop.f32.mrb[0].mxu0
        %v1269 = vadd.f32 0.0, %v1268
        %1270 = vmatprep.mubr.f32.mxu0 0.0
        %1271 = vmatmul.mubr.f32.gmra.mrb[0].mxu0 %v504
        %v1272 = vpop.f32.mrb[0].mxu0
        %v1273 = vadd.f32 0.0, %v1272
        %v1274 = vpop.f32.mrb[0].mxu0
        %v1275 = vadd.f32 0.0, %v1274
        %1276 = vdwg.mxu0
        %vm1277 = vcmp.eq.f32.partialorder %v706, 0.0
        %vm1278 = vcmp.eq.f32.partialorder %v708, 0.0
        %vm1279 = vcmp.eq.f32.partialorder %v867, 0.0
        %vm1280 = vcmp.eq.f32.partialorder %v869, 0.0
        %vm1281 = vcmp.eq.f32.partialorder %v1028, 0.0
        %vm1282 = vcmp.eq.f32.partialorder %v1030, 0.0
        %vm1283 = vcmp.eq.f32.partialorder %v1189, 0.0
        %vm1284 = vcmp.eq.f32.partialorder %v1191, 0.0
        %v1285 = vsel %vm1277, 1.0, %v706
        %v1286 = vsel %vm1278, 1.0, %v708
        %v1287 = vsel %vm1279, 1.0, %v867
        %v1288 = vsel %vm1280, 1.0, %v869
        %v1289 = vsel %vm1281, 1.0, %v1028
        %v1290 = vsel %vm1282, 1.0, %v1030
        %v1291 = vsel %vm1283, 1.0, %v1189
        %v1292 = vsel %vm1284, 1.0, %v1191
        %v1293 = vrcp.pop %v1285
        %v1294 = vmul.f32 9.0, %v1293
        %v1295 = vrcp.pop %v1286
        %v1296 = vmul.f32 9.0, %v1295
        %v1297 = vrcp.pop %v1287
        %v1298 = vmul.f32 9.0, %v1297
        %v1299 = vrcp.pop %v1288
        %v1300 = vmul.f32 9.0, %v1299
        %v1301 = vrcp.pop %v1289
        %v1302 = vmul.f32 9.0, %v1301
        %v1303 = vrcp.pop %v1290
        %v1304 = vmul.f32 9.0, %v1303
        %v1305 = vrcp.pop %v1291
        %v1306 = vmul.f32 9.0, %v1305
        %v1307 = vrcp.pop %v1292
        %v1308 = vmul.f32 9.0, %v1307
        %v1309 = vsel %vm1277, 0.0, %v1294
        %v1310 = vsel %vm1278, 0.0, %v1296
        %v1311 = vsel %vm1279, 0.0, %v1298
        %v1312 = vsel %vm1280, 0.0, %v1300
        %v1313 = vsel %vm1281, 0.0, %v1302
        %v1314 = vsel %vm1282, 0.0, %v1304
        %v1315 = vsel %vm1283, 0.0, %v1306
        %v1316 = vsel %vm1284, 0.0, %v1308
        %v1317 = vlaneseq
        %v1318 = vshrl.u32 %v1317, 7
        %v1319 = vsub.s32 0, %v1318
        %v1320 = vrot.slane %v1309, %v1319
        %v1321 = vlaneseq
        %v1322 = vshrl.u32 %v1321, 7
        %v1323 = vsub.s32 0, %v1322
        %v1324 = vrot.slane %v1310, %v1323
        %v1325 = vlaneseq
        %v1326 = vshrl.u32 %v1325, 7
        %v1327 = vsub.s32 0, %v1326
        %v1328 = vrot.slane %v1311, %v1327
        %v1329 = vlaneseq
        %v1330 = vshrl.u32 %v1329, 7
        %v1331 = vsub.s32 0, %v1330
        %v1332 = vrot.slane %v1312, %v1331
        %v1333 = vlaneseq
        %v1334 = vshrl.u32 %v1333, 7
        %v1335 = vsub.s32 0, %v1334
        %v1336 = vrot.slane %v1313, %v1335
        %v1337 = vlaneseq
        %v1338 = vshrl.u32 %v1337, 7
        %v1339 = vsub.s32 0, %v1338
        %v1340 = vrot.slane %v1314, %v1339
        %v1341 = vlaneseq
        %v1342 = vshrl.u32 %v1341, 7
        %v1343 = vsub.s32 0, %v1342
        %v1344 = vrot.slane %v1315, %v1343
        %v1345 = vlaneseq
        %v1346 = vshrl.u32 %v1345, 7
        %v1347 = vsub.s32 0, %v1346
        %v1348 = vrot.slane %v1316, %v1347
        %v1349 = vmul.f32 %v700, %v1320
        %v1350 = vmul.f32 %v702, %v1324
        %v1351 = vmul.f32 %v861, %v1328
        %v1352 = vmul.f32 %v863, %v1332
        %v1353 = vmul.f32 %v1022, %v1336
        %v1354 = vmul.f32 %v1024, %v1340
        %v1355 = vmul.f32 %v1183, %v1344
        %v1356 = vmul.f32 %v1185, %v1348
        %v1357 = vmul.f32 %v706, %v1320
        %v1358 = vmul.f32 %v708, %v1324
        %v1359 = vmul.f32 %v867, %v1328
        %v1360 = vmul.f32 %v869, %v1332
        %v1361 = vmul.f32 %v1028, %v1336
        %v1362 = vmul.f32 %v1030, %v1340
        %v1363 = vmul.f32 %v1189, %v1344
        %v1364 = vmul.f32 %v1191, %v1348
        %v1365 = vmul.f32 %v712, %v1320
        %v1366 = vmul.f32 %v714, %v1324
        %v1367 = vmul.f32 %v873, %v1328
        %v1368 = vmul.f32 %v875, %v1332
        %v1369 = vmul.f32 %v1034, %v1336
        %v1370 = vmul.f32 %v1036, %v1340
        %v1371 = vmul.f32 %v1195, %v1344
        %v1372 = vmul.f32 %v1197, %v1348
        %v1373 = vmul.f32 %v718, %v1320
        %v1374 = vmul.f32 %v720, %v1324
        %v1375 = vmul.f32 %v879, %v1328
        %v1376 = vmul.f32 %v881, %v1332
        %v1377 = vmul.f32 %v1040, %v1336
        %v1378 = vmul.f32 %v1042, %v1340
        %v1379 = vmul.f32 %v1201, %v1344
        %v1380 = vmul.f32 %v1203, %v1348
        %v1381 = vmul.f32 %v724, %v1320
        %v1382 = vmul.f32 %v726, %v1324
        %v1383 = vmul.f32 %v885, %v1328
        %v1384 = vmul.f32 %v887, %v1332
        %v1385 = vmul.f32 %v1046, %v1336
        %v1386 = vmul.f32 %v1048, %v1340
        %v1387 = vmul.f32 %v1207, %v1344
        %v1388 = vmul.f32 %v1209, %v1348
        %v1389 = vmul.f32 %v730, %v1320
        %v1390 = vmul.f32 %v732, %v1324
        %v1391 = vmul.f32 %v891, %v1328
        %v1392 = vmul.f32 %v893, %v1332
        %v1393 = vmul.f32 %v1052, %v1336
        %v1394 = vmul.f32 %v1054, %v1340
        %v1395 = vmul.f32 %v1213, %v1344
        %v1396 = vmul.f32 %v1215, %v1348
        %v1397 = vmul.f32 %v736, %v1320
        %v1398 = vmul.f32 %v738, %v1324
        %v1399 = vmul.f32 %v897, %v1328
        %v1400 = vmul.f32 %v899, %v1332
        %v1401 = vmul.f32 %v1058, %v1336
        %v1402 = vmul.f32 %v1060, %v1340
        %v1403 = vmul.f32 %v1219, %v1344
        %v1404 = vmul.f32 %v1221, %v1348
        %v1405 = vmul.f32 %v742, %v1320
        %v1406 = vmul.f32 %v744, %v1324
        %v1407 = vmul.f32 %v903, %v1328
        %v1408 = vmul.f32 %v905, %v1332
        %v1409 = vmul.f32 %v1064, %v1336
        %v1410 = vmul.f32 %v1066, %v1340
        %v1411 = vmul.f32 %v1225, %v1344
        %v1412 = vmul.f32 %v1227, %v1348
        %v1413 = vmul.f32 %v748, %v1320
        %v1414 = vmul.f32 %v750, %v1324
        %v1415 = vmul.f32 %v909, %v1328
        %v1416 = vmul.f32 %v911, %v1332
        %v1417 = vmul.f32 %v1070, %v1336
        %v1418 = vmul.f32 %v1072, %v1340
        %v1419 = vmul.f32 %v1231, %v1344
        %v1420 = vmul.f32 %v1233, %v1348
        %v1421 = vmul.f32 %v754, %v1320
        %v1422 = vmul.f32 %v756, %v1324
        %v1423 = vmul.f32 %v915, %v1328
        %v1424 = vmul.f32 %v917, %v1332
        %v1425 = vmul.f32 %v1076, %v1336
        %v1426 = vmul.f32 %v1078, %v1340
        %v1427 = vmul.f32 %v1237, %v1344
        %v1428 = vmul.f32 %v1239, %v1348
        %v1429 = vmul.f32 %v760, %v1320
        %v1430 = vmul.f32 %v762, %v1324
        %v1431 = vmul.f32 %v921, %v1328
        %v1432 = vmul.f32 %v923, %v1332
        %v1433 = vmul.f32 %v1082, %v1336
        %v1434 = vmul.f32 %v1084, %v1340
        %v1435 = vmul.f32 %v1243, %v1344
        %v1436 = vmul.f32 %v1245, %v1348
        %v1437 = vmul.f32 %v766, %v1320
        %v1438 = vmul.f32 %v768, %v1324
        %v1439 = vmul.f32 %v927, %v1328
        %v1440 = vmul.f32 %v929, %v1332
        %v1441 = vmul.f32 %v1088, %v1336
        %v1442 = vmul.f32 %v1090, %v1340
        %v1443 = vmul.f32 %v1249, %v1344
        %v1444 = vmul.f32 %v1251, %v1348
        %v1445 = vmul.f32 %v772, %v1320
        %v1446 = vmul.f32 %v774, %v1324
        %v1447 = vmul.f32 %v933, %v1328
        %v1448 = vmul.f32 %v935, %v1332
        %v1449 = vmul.f32 %v1094, %v1336
        %v1450 = vmul.f32 %v1096, %v1340
        %v1451 = vmul.f32 %v1255, %v1344
        %v1452 = vmul.f32 %v1257, %v1348
        %v1453 = vmul.f32 %v778, %v1320
        %v1454 = vmul.f32 %v780, %v1324
        %v1455 = vmul.f32 %v939, %v1328
        %v1456 = vmul.f32 %v941, %v1332
        %v1457 = vmul.f32 %v1100, %v1336
        %v1458 = vmul.f32 %v1102, %v1340
        %v1459 = vmul.f32 %v1261, %v1344
        %v1460 = vmul.f32 %v1263, %v1348
        %v1461 = vmul.f32 %v784, %v1320
        %v1462 = vmul.f32 %v786, %v1324
        %v1463 = vmul.f32 %v945, %v1328
        %v1464 = vmul.f32 %v947, %v1332
        %v1465 = vmul.f32 %v1106, %v1336
        %v1466 = vmul.f32 %v1108, %v1340
        %v1467 = vmul.f32 %v1267, %v1344
        %v1468 = vmul.f32 %v1269, %v1348
        %v1469 = vmul.f32 %v790, %v1320
        %v1470 = vmul.f32 %v792, %v1324
        %v1471 = vmul.f32 %v951, %v1328
        %v1472 = vmul.f32 %v953, %v1332
        %v1473 = vmul.f32 %v1112, %v1336
        %v1474 = vmul.f32 %v1114, %v1340
        %v1475 = vmul.f32 %v1273, %v1344
        %v1476 = vmul.f32 %v1275, %v1348
        %v1477 = vadd.f32 %v1349, %v1350
        %v1478 = vadd.f32 %v1477, %v1351
        %v1479 = vadd.f32 %v1478, %v1352
        %v1480 = vadd.f32 %v1479, %v1353
        %v1481 = vadd.f32 %v1480, %v1354
        %v1482 = vadd.f32 %v1481, %v1355
        %v1483 = vadd.f32 %v1482, %v1356
        %1484 = vadd.xlane.f32.xlu0 %v1483
        %v1485 = vpop.xlane.xlu0 %1484
        %v1486 = vadd.f32 %v1357, %v1358
        %v1487 = vadd.f32 %v1486, %v1359
        %v1488 = vadd.f32 %v1487, %v1360
        %v1489 = vadd.f32 %v1488, %v1361
        %v1490 = vadd.f32 %v1489, %v1362
        %v1491 = vadd.f32 %v1490, %v1363
        %v1492 = vadd.f32 %v1491, %v1364
        %1493 = vadd.xlane.f32.xlu0 %v1492
        %v1494 = vpop.xlane.xlu0 %1493
        %v1495 = vadd.f32 %v1365, %v1366
        %v1496 = vadd.f32 %v1495, %v1367
        %v1497 = vadd.f32 %v1496, %v1368
        %v1498 = vadd.f32 %v1497, %v1369
        %v1499 = vadd.f32 %v1498, %v1370
        %v1500 = vadd.f32 %v1499, %v1371
        %v1501 = vadd.f32 %v1500, %v1372
        %1502 = vadd.xlane.f32.xlu0 %v1501
        %v1503 = vpop.xlane.xlu0 %1502
        %v1504 = vadd.f32 %v1373, %v1374
        %v1505 = vadd.f32 %v1504, %v1375
        %v1506 = vadd.f32 %v1505, %v1376
        %v1507 = vadd.f32 %v1506, %v1377
        %v1508 = vadd.f32 %v1507, %v1378
        %v1509 = vadd.f32 %v1508, %v1379
        %v1510 = vadd.f32 %v1509, %v1380
        %1511 = vadd.xlane.f32.xlu0 %v1510
        %v1512 = vpop.xlane.xlu0 %1511
        %v1513 = vadd.f32 %v1381, %v1382
        %v1514 = vadd.f32 %v1513, %v1383
        %v1515 = vadd.f32 %v1514, %v1384
        %v1516 = vadd.f32 %v1515, %v1385
        %v1517 = vadd.f32 %v1516, %v1386
        %v1518 = vadd.f32 %v1517, %v1387
        %v1519 = vadd.f32 %v1518, %v1388
        %1520 = vadd.xlane.f32.xlu0 %v1519
        %v1521 = vpop.xlane.xlu0 %1520
        %v1522 = vadd.f32 %v1389, %v1390
        %v1523 = vadd.f32 %v1522, %v1391
        %v1524 = vadd.f32 %v1523, %v1392
        %v1525 = vadd.f32 %v1524, %v1393
        %v1526 = vadd.f32 %v1525, %v1394
        %v1527 = vadd.f32 %v1526, %v1395
        %v1528 = vadd.f32 %v1527, %v1396
        %1529 = vadd.xlane.f32.xlu0 %v1528
        %v1530 = vpop.xlane.xlu0 %1529
        %v1531 = vadd.f32 %v1397, %v1398
        %v1532 = vadd.f32 %v1531, %v1399
        %v1533 = vadd.f32 %v1532, %v1400
        %v1534 = vadd.f32 %v1533, %v1401
        %v1535 = vadd.f32 %v1534, %v1402
        %v1536 = vadd.f32 %v1535, %v1403
        %v1537 = vadd.f32 %v1536, %v1404
        %1538 = vadd.xlane.f32.xlu0 %v1537
        %v1539 = vpop.xlane.xlu0 %1538
        %v1540 = vadd.f32 %v1405, %v1406
        %v1541 = vadd.f32 %v1540, %v1407
        %v1542 = vadd.f32 %v1541, %v1408
        %v1543 = vadd.f32 %v1542, %v1409
        %v1544 = vadd.f32 %v1543, %v1410
        %v1545 = vadd.f32 %v1544, %v1411
        %v1546 = vadd.f32 %v1545, %v1412
        %1547 = vadd.xlane.f32.xlu0 %v1546
        %v1548 = vpop.xlane.xlu0 %1547
        %v1549 = vadd.f32 %v1413, %v1414
        %v1550 = vadd.f32 %v1549, %v1415
        %v1551 = vadd.f32 %v1550, %v1416
        %v1552 = vadd.f32 %v1551, %v1417
        %v1553 = vadd.f32 %v1552, %v1418
        %v1554 = vadd.f32 %v1553, %v1419
        %v1555 = vadd.f32 %v1554, %v1420
        %1556 = vadd.xlane.f32.xlu0 %v1555
        %v1557 = vpop.xlane.xlu0 %1556
        %v1558 = vadd.f32 %v1421, %v1422
        %v1559 = vadd.f32 %v1558, %v1423
        %v1560 = vadd.f32 %v1559, %v1424
        %v1561 = vadd.f32 %v1560, %v1425
        %v1562 = vadd.f32 %v1561, %v1426
        %v1563 = vadd.f32 %v1562, %v1427
        %v1564 = vadd.f32 %v1563, %v1428
        %1565 = vadd.xlane.f32.xlu0 %v1564
        %v1566 = vpop.xlane.xlu0 %1565
        %v1567 = vadd.f32 %v1429, %v1430
        %v1568 = vadd.f32 %v1567, %v1431
        %v1569 = vadd.f32 %v1568, %v1432
        %v1570 = vadd.f32 %v1569, %v1433
        %v1571 = vadd.f32 %v1570, %v1434
        %v1572 = vadd.f32 %v1571, %v1435
        %v1573 = vadd.f32 %v1572, %v1436
        %1574 = vadd.xlane.f32.xlu0 %v1573
        %v1575 = vpop.xlane.xlu0 %1574
        %v1576 = vadd.f32 %v1437, %v1438
        %v1577 = vadd.f32 %v1576, %v1439
        %v1578 = vadd.f32 %v1577, %v1440
        %v1579 = vadd.f32 %v1578, %v1441
        %v1580 = vadd.f32 %v1579, %v1442
        %v1581 = vadd.f32 %v1580, %v1443
        %v1582 = vadd.f32 %v1581, %v1444
        %1583 = vadd.xlane.f32.xlu0 %v1582
        %v1584 = vpop.xlane.xlu0 %1583
        %v1585 = vadd.f32 %v1445, %v1446
        %v1586 = vadd.f32 %v1585, %v1447
        %v1587 = vadd.f32 %v1586, %v1448
        %v1588 = vadd.f32 %v1587, %v1449
        %v1589 = vadd.f32 %v1588, %v1450
        %v1590 = vadd.f32 %v1589, %v1451
        %v1591 = vadd.f32 %v1590, %v1452
        %1592 = vadd.xlane.f32.xlu0 %v1591
        %v1593 = vpop.xlane.xlu0 %1592
        %v1594 = vadd.f32 %v1453, %v1454
        %v1595 = vadd.f32 %v1594, %v1455
        %v1596 = vadd.f32 %v1595, %v1456
        %v1597 = vadd.f32 %v1596, %v1457
        %v1598 = vadd.f32 %v1597, %v1458
        %v1599 = vadd.f32 %v1598, %v1459
        %v1600 = vadd.f32 %v1599, %v1460
        %1601 = vadd.xlane.f32.xlu0 %v1600
        %v1602 = vpop.xlane.xlu0 %1601
        %v1603 = vadd.f32 %v1461, %v1462
        %v1604 = vadd.f32 %v1603, %v1463
        %v1605 = vadd.f32 %v1604, %v1464
        %v1606 = vadd.f32 %v1605, %v1465
        %v1607 = vadd.f32 %v1606, %v1466
        %v1608 = vadd.f32 %v1607, %v1467
        %v1609 = vadd.f32 %v1608, %v1468
        %1610 = vadd.xlane.f32.xlu0 %v1609
        %v1611 = vpop.xlane.xlu0 %1610
        %v1612 = vadd.f32 %v1469, %v1470
        %v1613 = vadd.f32 %v1612, %v1471
        %v1614 = vadd.f32 %v1613, %v1472
        %v1615 = vadd.f32 %v1614, %v1473
        %v1616 = vadd.f32 %v1615, %v1474
        %v1617 = vadd.f32 %v1616, %v1475
        %v1618 = vadd.f32 %v1617, %v1476
        %1619 = vadd.xlane.f32.xlu0 %v1618
        %v1620 = vpop.xlane.xlu0 %1619
        %v1621 = vmul.f32 %v1349, %v1349
        %v1622 = vmul.f32 %v1350, %v1350
        %v1623 = vmul.f32 %v1351, %v1351
        %v1624 = vmul.f32 %v1352, %v1352
        %v1625 = vmul.f32 %v1353, %v1353
        %v1626 = vmul.f32 %v1354, %v1354
        %v1627 = vmul.f32 %v1355, %v1355
        %v1628 = vmul.f32 %v1356, %v1356
        %v1629 = vmul.f32 %v1357, %v1357
        %v1630 = vmul.f32 %v1358, %v1358
        %v1631 = vmul.f32 %v1359, %v1359
        %v1632 = vmul.f32 %v1360, %v1360
        %v1633 = vmul.f32 %v1361, %v1361
        %v1634 = vmul.f32 %v1362, %v1362
        %v1635 = vmul.f32 %v1363, %v1363
        %v1636 = vmul.f32 %v1364, %v1364
        %v1637 = vmul.f32 %v1365, %v1365
        %v1638 = vmul.f32 %v1366, %v1366
        %v1639 = vmul.f32 %v1367, %v1367
        %v1640 = vmul.f32 %v1368, %v1368
        %v1641 = vmul.f32 %v1369, %v1369
        %v1642 = vmul.f32 %v1370, %v1370
        %v1643 = vmul.f32 %v1371, %v1371
        %v1644 = vmul.f32 %v1372, %v1372
        %v1645 = vmul.f32 %v1373, %v1373
        %v1646 = vmul.f32 %v1374, %v1374
        %v1647 = vmul.f32 %v1375, %v1375
        %v1648 = vmul.f32 %v1376, %v1376
        %v1649 = vmul.f32 %v1377, %v1377
        %v1650 = vmul.f32 %v1378, %v1378
        %v1651 = vmul.f32 %v1379, %v1379
        %v1652 = vmul.f32 %v1380, %v1380
        %v1653 = vmul.f32 %v1381, %v1381
        %v1654 = vmul.f32 %v1382, %v1382
        %v1655 = vmul.f32 %v1383, %v1383
        %v1656 = vmul.f32 %v1384, %v1384
        %v1657 = vmul.f32 %v1385, %v1385
        %v1658 = vmul.f32 %v1386, %v1386
        %v1659 = vmul.f32 %v1387, %v1387
        %v1660 = vmul.f32 %v1388, %v1388
        %v1661 = vmul.f32 %v1389, %v1389
        %v1662 = vmul.f32 %v1390, %v1390
        %v1663 = vmul.f32 %v1391, %v1391
        %v1664 = vmul.f32 %v1392, %v1392
        %v1665 = vmul.f32 %v1393, %v1393
        %v1666 = vmul.f32 %v1394, %v1394
        %v1667 = vmul.f32 %v1395, %v1395
        %v1668 = vmul.f32 %v1396, %v1396
        %v1669 = vmul.f32 %v1397, %v1397
        %v1670 = vmul.f32 %v1398, %v1398
        %v1671 = vmul.f32 %v1399, %v1399
        %v1672 = vmul.f32 %v1400, %v1400
        %v1673 = vmul.f32 %v1401, %v1401
        %v1674 = vmul.f32 %v1402, %v1402
        %v1675 = vmul.f32 %v1403, %v1403
        %v1676 = vmul.f32 %v1404, %v1404
        %v1677 = vmul.f32 %v1405, %v1405
        %v1678 = vmul.f32 %v1406, %v1406
        %v1679 = vmul.f32 %v1407, %v1407
        %v1680 = vmul.f32 %v1408, %v1408
        %v1681 = vmul.f32 %v1409, %v1409
        %v1682 = vmul.f32 %v1410, %v1410
        %v1683 = vmul.f32 %v1411, %v1411
        %v1684 = vmul.f32 %v1412, %v1412
        %v1685 = vmul.f32 %v1413, %v1413
        %v1686 = vmul.f32 %v1414, %v1414
        %v1687 = vmul.f32 %v1415, %v1415
        %v1688 = vmul.f32 %v1416, %v1416
        %v1689 = vmul.f32 %v1417, %v1417
        %v1690 = vmul.f32 %v1418, %v1418
        %v1691 = vmul.f32 %v1419, %v1419
        %v1692 = vmul.f32 %v1420, %v1420
        %v1693 = vmul.f32 %v1421, %v1421
        %v1694 = vmul.f32 %v1422, %v1422
        %v1695 = vmul.f32 %v1423, %v1423
        %v1696 = vmul.f32 %v1424, %v1424
        %v1697 = vmul.f32 %v1425, %v1425
        %v1698 = vmul.f32 %v1426, %v1426
        %v1699 = vmul.f32 %v1427, %v1427
        %v1700 = vmul.f32 %v1428, %v1428
        %v1701 = vmul.f32 %v1429, %v1429
        %v1702 = vmul.f32 %v1430, %v1430
        %v1703 = vmul.f32 %v1431, %v1431
        %v1704 = vmul.f32 %v1432, %v1432
        %v1705 = vmul.f32 %v1433, %v1433
        %v1706 = vmul.f32 %v1434, %v1434
        %v1707 = vmul.f32 %v1435, %v1435
        %v1708 = vmul.f32 %v1436, %v1436
        %v1709 = vmul.f32 %v1437, %v1437
        %v1710 = vmul.f32 %v1438, %v1438
        %v1711 = vmul.f32 %v1439, %v1439
        %v1712 = vmul.f32 %v1440, %v1440
        %v1713 = vmul.f32 %v1441, %v1441
        %v1714 = vmul.f32 %v1442, %v1442
        %v1715 = vmul.f32 %v1443, %v1443
        %v1716 = vmul.f32 %v1444, %v1444
        %v1717 = vmul.f32 %v1445, %v1445
        %v1718 = vmul.f32 %v1446, %v1446
        %v1719 = vmul.f32 %v1447, %v1447
        %v1720 = vmul.f32 %v1448, %v1448
        %v1721 = vmul.f32 %v1449, %v1449
        %v1722 = vmul.f32 %v1450, %v1450
        %v1723 = vmul.f32 %v1451, %v1451
        %v1724 = vmul.f32 %v1452, %v1452
        %v1725 = vmul.f32 %v1453, %v1453
        %v1726 = vmul.f32 %v1454, %v1454
        %v1727 = vmul.f32 %v1455, %v1455
        %v1728 = vmul.f32 %v1456, %v1456
        %v1729 = vmul.f32 %v1457, %v1457
        %v1730 = vmul.f32 %v1458, %v1458
        %v1731 = vmul.f32 %v1459, %v1459
        %v1732 = vmul.f32 %v1460, %v1460
        %v1733 = vmul.f32 %v1461, %v1461
        %v1734 = vmul.f32 %v1462, %v1462
        %v1735 = vmul.f32 %v1463, %v1463
        %v1736 = vmul.f32 %v1464, %v1464
        %v1737 = vmul.f32 %v1465, %v1465
        %v1738 = vmul.f32 %v1466, %v1466
        %v1739 = vmul.f32 %v1467, %v1467
        %v1740 = vmul.f32 %v1468, %v1468
        %v1741 = vmul.f32 %v1469, %v1469
        %v1742 = vmul.f32 %v1470, %v1470
        %v1743 = vmul.f32 %v1471, %v1471
        %v1744 = vmul.f32 %v1472, %v1472
        %v1745 = vmul.f32 %v1473, %v1473
        %v1746 = vmul.f32 %v1474, %v1474
        %v1747 = vmul.f32 %v1475, %v1475
        %v1748 = vmul.f32 %v1476, %v1476
        %v1749 = vadd.f32 %v1621, %v1622
        %v1750 = vadd.f32 %v1749, %v1623
        %v1751 = vadd.f32 %v1750, %v1624
        %v1752 = vadd.f32 %v1751, %v1625
        %v1753 = vadd.f32 %v1752, %v1626
        %v1754 = vadd.f32 %v1753, %v1627
        %v1755 = vadd.f32 %v1754, %v1628
        %1756 = vadd.xlane.f32.xlu0 %v1755
        %v1757 = vpop.xlane.xlu0 %1756
        %v1758 = vadd.f32 %v1629, %v1630
        %v1759 = vadd.f32 %v1758, %v1631
        %v1760 = vadd.f32 %v1759, %v1632
        %v1761 = vadd.f32 %v1760, %v1633
        %v1762 = vadd.f32 %v1761, %v1634
        %v1763 = vadd.f32 %v1762, %v1635
        %v1764 = vadd.f32 %v1763, %v1636
        %1765 = vadd.xlane.f32.xlu0 %v1764
        %v1766 = vpop.xlane.xlu0 %1765
        %v1767 = vadd.f32 %v1637, %v1638
        %v1768 = vadd.f32 %v1767, %v1639
        %v1769 = vadd.f32 %v1768, %v1640
        %v1770 = vadd.f32 %v1769, %v1641
        %v1771 = vadd.f32 %v1770, %v1642
        %v1772 = vadd.f32 %v1771, %v1643
        %v1773 = vadd.f32 %v1772, %v1644
        %1774 = vadd.xlane.f32.xlu0 %v1773
        %v1775 = vpop.xlane.xlu0 %1774
        %v1776 = vadd.f32 %v1645, %v1646
        %v1777 = vadd.f32 %v1776, %v1647
        %v1778 = vadd.f32 %v1777, %v1648
        %v1779 = vadd.f32 %v1778, %v1649
        %v1780 = vadd.f32 %v1779, %v1650
        %v1781 = vadd.f32 %v1780, %v1651
        %v1782 = vadd.f32 %v1781, %v1652
        %1783 = vadd.xlane.f32.xlu0 %v1782
        %v1784 = vpop.xlane.xlu0 %1783
        %v1785 = vadd.f32 %v1653, %v1654
        %v1786 = vadd.f32 %v1785, %v1655
        %v1787 = vadd.f32 %v1786, %v1656
        %v1788 = vadd.f32 %v1787, %v1657
        %v1789 = vadd.f32 %v1788, %v1658
        %v1790 = vadd.f32 %v1789, %v1659
        %v1791 = vadd.f32 %v1790, %v1660
        %1792 = vadd.xlane.f32.xlu0 %v1791
        %v1793 = vpop.xlane.xlu0 %1792
        %v1794 = vadd.f32 %v1661, %v1662
        %v1795 = vadd.f32 %v1794, %v1663
        %v1796 = vadd.f32 %v1795, %v1664
        %v1797 = vadd.f32 %v1796, %v1665
        %v1798 = vadd.f32 %v1797, %v1666
        %v1799 = vadd.f32 %v1798, %v1667
        %v1800 = vadd.f32 %v1799, %v1668
        %1801 = vadd.xlane.f32.xlu0 %v1800
        %v1802 = vpop.xlane.xlu0 %1801
        %v1803 = vadd.f32 %v1669, %v1670
        %v1804 = vadd.f32 %v1803, %v1671
        %v1805 = vadd.f32 %v1804, %v1672
        %v1806 = vadd.f32 %v1805, %v1673
        %v1807 = vadd.f32 %v1806, %v1674
        %v1808 = vadd.f32 %v1807, %v1675
        %v1809 = vadd.f32 %v1808, %v1676
        %1810 = vadd.xlane.f32.xlu0 %v1809
        %v1811 = vpop.xlane.xlu0 %1810
        %v1812 = vadd.f32 %v1677, %v1678
        %v1813 = vadd.f32 %v1812, %v1679
        %v1814 = vadd.f32 %v1813, %v1680
        %v1815 = vadd.f32 %v1814, %v1681
        %v1816 = vadd.f32 %v1815, %v1682
        %v1817 = vadd.f32 %v1816, %v1683
        %v1818 = vadd.f32 %v1817, %v1684
        %1819 = vadd.xlane.f32.xlu0 %v1818
        %v1820 = vpop.xlane.xlu0 %1819
        %v1821 = vadd.f32 %v1685, %v1686
        %v1822 = vadd.f32 %v1821, %v1687
        %v1823 = vadd.f32 %v1822, %v1688
        %v1824 = vadd.f32 %v1823, %v1689
        %v1825 = vadd.f32 %v1824, %v1690
        %v1826 = vadd.f32 %v1825, %v1691
        %v1827 = vadd.f32 %v1826, %v1692
        %1828 = vadd.xlane.f32.xlu0 %v1827
        %v1829 = vpop.xlane.xlu0 %1828
        %v1830 = vadd.f32 %v1693, %v1694
        %v1831 = vadd.f32 %v1830, %v1695
        %v1832 = vadd.f32 %v1831, %v1696
        %v1833 = vadd.f32 %v1832, %v1697
        %v1834 = vadd.f32 %v1833, %v1698
        %v1835 = vadd.f32 %v1834, %v1699
        %v1836 = vadd.f32 %v1835, %v1700
        %1837 = vadd.xlane.f32.xlu0 %v1836
        %v1838 = vpop.xlane.xlu0 %1837
        %v1839 = vadd.f32 %v1701, %v1702
        %v1840 = vadd.f32 %v1839, %v1703
        %v1841 = vadd.f32 %v1840, %v1704
        %v1842 = vadd.f32 %v1841, %v1705
        %v1843 = vadd.f32 %v1842, %v1706
        %v1844 = vadd.f32 %v1843, %v1707
        %v1845 = vadd.f32 %v1844, %v1708
        %1846 = vadd.xlane.f32.xlu0 %v1845
        %v1847 = vpop.xlane.xlu0 %1846
        %v1848 = vadd.f32 %v1709, %v1710
        %v1849 = vadd.f32 %v1848, %v1711
        %v1850 = vadd.f32 %v1849, %v1712
        %v1851 = vadd.f32 %v1850, %v1713
        %v1852 = vadd.f32 %v1851, %v1714
        %v1853 = vadd.f32 %v1852, %v1715
        %v1854 = vadd.f32 %v1853, %v1716
        %1855 = vadd.xlane.f32.xlu0 %v1854
        %v1856 = vpop.xlane.xlu0 %1855
        %v1857 = vadd.f32 %v1717, %v1718
        %v1858 = vadd.f32 %v1857, %v1719
        %v1859 = vadd.f32 %v1858, %v1720
        %v1860 = vadd.f32 %v1859, %v1721
        %v1861 = vadd.f32 %v1860, %v1722
        %v1862 = vadd.f32 %v1861, %v1723
        %v1863 = vadd.f32 %v1862, %v1724
        %1864 = vadd.xlane.f32.xlu0 %v1863
        %v1865 = vpop.xlane.xlu0 %1864
        %v1866 = vadd.f32 %v1725, %v1726
        %v1867 = vadd.f32 %v1866, %v1727
        %v1868 = vadd.f32 %v1867, %v1728
        %v1869 = vadd.f32 %v1868, %v1729
        %v1870 = vadd.f32 %v1869, %v1730
        %v1871 = vadd.f32 %v1870, %v1731
        %v1872 = vadd.f32 %v1871, %v1732
        %1873 = vadd.xlane.f32.xlu0 %v1872
        %v1874 = vpop.xlane.xlu0 %1873
        %v1875 = vadd.f32 %v1733, %v1734
        %v1876 = vadd.f32 %v1875, %v1735
        %v1877 = vadd.f32 %v1876, %v1736
        %v1878 = vadd.f32 %v1877, %v1737
        %v1879 = vadd.f32 %v1878, %v1738
        %v1880 = vadd.f32 %v1879, %v1739
        %v1881 = vadd.f32 %v1880, %v1740
        %1882 = vadd.xlane.f32.xlu0 %v1881
        %v1883 = vpop.xlane.xlu0 %1882
        %v1884 = vadd.f32 %v1741, %v1742
        %v1885 = vadd.f32 %v1884, %v1743
        %v1886 = vadd.f32 %v1885, %v1744
        %v1887 = vadd.f32 %v1886, %v1745
        %v1888 = vadd.f32 %v1887, %v1746
        %v1889 = vadd.f32 %v1888, %v1747
        %v1890 = vadd.f32 %v1889, %v1748
        %1891 = vadd.xlane.f32.xlu0 %v1890
        %v1892 = vpop.xlane.xlu0 %1891
        %vm1893 = vcmask 7168
        %v1894 = vsel %vm1893, %v1485, %v1757
        %v1895 = vsel %vm1893, %v1494, %v1766
        %v1896 = vsel %vm1893, %v1503, %v1775
        %v1897 = vsel %vm1893, %v1512, %v1784
        %v1898 = vsel %vm1893, %v1521, %v1793
        %v1899 = vsel %vm1893, %v1530, %v1802
        %v1900 = vsel %vm1893, %v1539, %v1811
        %v1901 = vsel %vm1893, %v1548, %v1820
        %v1902 = vsel %vm1893, %v1557, %v1829
        %v1903 = vsel %vm1893, %v1566, %v1838
        %v1904 = vsel %vm1893, %v1575, %v1847
        %v1905 = vsel %vm1893, %v1584, %v1856
        %v1906 = vsel %vm1893, %v1593, %v1865
        %v1907 = vsel %vm1893, %v1602, %v1874
        %v1908 = vsel %vm1893, %v1611, %v1883
        %v1909 = vsel %vm1893, %v1620, %v1892
        %vm1910 = vcmask 15360
        %1911 = vst.msk [vmem:[%s488] sm:$0xff] %vm1910, %v1894
        %1912 = vst.msk [vmem:[%s488 + $0x8] sm:$0xff] %vm1910, %v1895
        %1913 = vst.msk [vmem:[%s488 + $0x10] sm:$0xff] %vm1910, %v1896
        %1914 = vst.msk [vmem:[%s488 + $0x18] sm:$0xff] %vm1910, %v1897
        %1915 = vst.msk [vmem:[%s488 + $0x20] sm:$0xff] %vm1910, %v1898
        %1916 = vst.msk [vmem:[%s488 + $0x28] sm:$0xff] %vm1910, %v1899
        %1917 = vst.msk [vmem:[%s488 + $0x30] sm:$0xff] %vm1910, %v1900
        %1918 = vst.msk [vmem:[%s488 + $0x38] sm:$0xff] %vm1910, %v1901
        %1919 = vst.msk [vmem:[%s488 + $0x40] sm:$0xff] %vm1910, %v1902
        %1920 = vst.msk [vmem:[%s488 + $0x48] sm:$0xff] %vm1910, %v1903
        %1921 = vst.msk [vmem:[%s488 + $0x50] sm:$0xff] %vm1910, %v1904
        %1922 = vst.msk [vmem:[%s488 + $0x58] sm:$0xff] %vm1910, %v1905
        %1923 = vst.msk [vmem:[%s488 + $0x60] sm:$0xff] %vm1910, %v1906
        %1924 = vst.msk [vmem:[%s488 + $0x68] sm:$0xff] %vm1910, %v1907
        %1925 = vst.msk [vmem:[%s488 + $0x70] sm:$0xff] %vm1910, %v1908
        %1926 = vst.msk [vmem:[%s488 + $0x78] sm:$0xff] %vm1910, %v1909
        %v1927 = vld [vmem:[%s2] sm:$0xff]
        %1929 = vset.pattern.permute.xlu0 0
        %1930 = vperm.xlu0 %1929, %v1927
        %v1931 = vpop.permute.xlu0 %1930
        %v1933 = vadd.f32 %v1349, %v1931
        %v1934 = vadd.f32 %v1350, %v1931
        %v1935 = vadd.f32 %v1351, %v1931
        %v1936 = vadd.f32 %v1352, %v1931
        %v1937 = vadd.f32 %v1353, %v1931
        %v1938 = vadd.f32 %v1354, %v1931
        %v1939 = vadd.f32 %v1355, %v1931
        %v1940 = vadd.f32 %v1356, %v1931
        %1941 = vst [vmem:[%s482] sm:$0xff] %v1933
        %1942 = vst [vmem:[%s482 + $0x8] sm:$0xff] %v1934
        %1943 = vst [vmem:[%s482 + $0x10] sm:$0xff] %v1935
        %1944 = vst [vmem:[%s482 + $0x18] sm:$0xff] %v1936
        %1945 = vst [vmem:[%s482 + $0x20] sm:$0xff] %v1937
        %1946 = vst [vmem:[%s482 + $0x28] sm:$0xff] %v1938
        %1947 = vst [vmem:[%s482 + $0x30] sm:$0xff] %v1939
        %1948 = vst [vmem:[%s482 + $0x38] sm:$0xff] %v1940
        %s1949 = smul.u32 4, %s16
        %p1950 = scmp.lt.s32.totalorder %s1949, 7
        %s1951 = scalar_select %p1950, %s1949, 7
        %s1952 = smul.addr %s1951, 2
        %s1953 = smul.addr %s1952, 8
        %s1954 = scalar_lea.vmem %s3, %s1953
        %p1955 = scmp.lt.s32.totalorder %s16, 1
        %s1956 = scalar_select %p1955, %s16, 1
        %s1957 = smul.addr %s1956, 16
        %s1958 = smul.addr %s1957, 8
        %s1959 = scalar_lea.vmem %s4, %s1958
        // Predicated region
        $region56: #{sparse_scaled_bn_conv2d.2} parent=50 // pred_check
          %p1960 = pneg %p102
        $region57: #{sparse_scaled_bn_conv2d.2} parent=50 // pred_check_branch
          %1962 = sbr.rel (%p1960) target = $region59
        $region58: #{sparse_scaled_bn_conv2d.2} parent=50 // pred_region
          %s1963 = smul.u32 4, %s16
        $region59: #{sparse_scaled_bn_conv2d.2} parent=50 // pred_fallthru
          _
        // Predicated region
        $region60: #{sparse_scaled_bn_conv2d.2} parent=50 // pred_check
          %p1964 = pneg %p128
        $region61: #{sparse_scaled_bn_conv2d.2} parent=50 // pred_check_branch
          %1966 = sbr.rel (%p1964) target = $region63
        $region62: #{sparse_scaled_bn_conv2d.2} parent=50 // pred_region
          _
        $region63: #{sparse_scaled_bn_conv2d.2} parent=50 // pred_fallthru
          _
      $region51: #{sparse_scaled_bn_conv2d.2} parent=5 // pred_fallthru
        _
      %p1967 = scmp.le.s32.totalorder 2, %s11
      // Predicated region
      $region64: #{sparse_scaled_bn_conv2d.2} parent=5 // pred_check
        %p1968 = pneg %p1967
      $region65: #{sparse_scaled_bn_conv2d.2} parent=5 // pred_check_branch
        %1970 = sbr.rel (%p1968) target = $region67
      $region66: #{sparse_scaled_bn_conv2d.2} parent=5 // pred_region
        %s1971 = ssub.s32 %s11, 2
        // Predicated region
        $region68: #{sparse_scaled_bn_conv2d.2} parent=66 // pred_check
          %p1972 = pneg %p108
        $region69: #{sparse_scaled_bn_conv2d.2} parent=66 // pred_check_branch
          %1974 = sbr.rel (%p1972) target = $region71
        $region70: #{sparse_scaled_bn_conv2d.2} parent=66 // pred_region
          %s1975 = smul.u32 4, %s17
          %p1976 = scmp.lt.s32.totalorder %s1975, 7
          %s1977 = scalar_select %p1976, %s1975, 7
          %s1978 = smul.addr %s1977, 2
          %s1979 = smul.addr %s1978, 8
          %s1980 = scalar_lea.vmem %s3, %s1979
        $region71: #{sparse_scaled_bn_conv2d.2} parent=66 // pred_fallthru
          _
        // Predicated region
        $region72: #{sparse_scaled_bn_conv2d.2} parent=66 // pred_check
          %p1981 = pneg %p134
        $region73: #{sparse_scaled_bn_conv2d.2} parent=66 // pred_check_branch
          %1983 = sbr.rel (%p1981) target = $region75
        $region74: #{sparse_scaled_bn_conv2d.2} parent=66 // pred_region
          %p1984 = scmp.lt.s32.totalorder %s17, 1
          %s1985 = scalar_select %p1984, %s17, 1
          %s1986 = smul.addr %s1985, 16
          %s1987 = smul.addr %s1986, 8
          %s1988 = scalar_lea.vmem %s4, %s1987
        $region75: #{sparse_scaled_bn_conv2d.2} parent=66 // pred_fallthru
          _
      $region67: #{sparse_scaled_bn_conv2d.2} parent=5 // pred_fallthru
        _
    $region6: #{sparse_scaled_bn_conv2d.2} parent=1 // loop_footer
      %s15 = sadd.s32 1, %s11
    $region7: #{sparse_scaled_bn_conv2d.2} parent=1 // loop_footer_branch
      %10 = sbr.rel target = $region3
    $region8: #{sparse_scaled_bn_conv2d.2} parent=1 // loop_exit
      _

</llo_original>
